<compile_context>
chip_gen: v5e
topology: v5e:2x2
jax: 0.10.0
libtpu: 0.0.40
codegen_flags: <defaults>
</compile_context>

<pallas_src>
import functools
import math

import jax
import jax.numpy as jnp
import numpy as np
from jax import lax
from jax.experimental import pallas as pl
from jax.experimental.pallas import tpu as pltpu

_BF16 = jnp.bfloat16
_F32 = jnp.float32

# Contract the sequence axis (dim 0) of both operands: (S,H) x (S,D) -> (H,D).
_POOL_DIMS = (((0,), (0,)), ((), ()))


# ------------------------------------------------------------------ kernel ---

def _layernorm_1pass(x, gamma, beta, eps):
    mu = jnp.mean(x, axis=-1, keepdims=True)
    ex2 = jnp.mean(x * x, axis=-1, keepdims=True)
    var = jnp.maximum(ex2 - mu * mu, 0.0)
    return (x - mu) * lax.rsqrt(var + eps) * gamma + beta


def _softmax_over_seq(scores, mask):
    # scores: (S, H); softmax over the sequence axis (axis 0). Scale is already
    # folded into the projection weights, so only the additive mask is applied here.
    s = scores + mask
    s = s - jnp.max(s, axis=0, keepdims=True)
    e = jnp.exp(s)
    return e * pl.reciprocal(jnp.sum(e, axis=0, keepdims=True), approx=True)


def fastformer_layer_kernel(
    h_ref, mask_ref,
    wqkq_ref, bqkq_ref,            # fused [wq | wk | wqa*scale] : (D, 2D+H) bf16 / (1, 2D+H) f32
    wka_ref, bka_ref,              # key_att with scale folded in
    wt_ref, bt_ref,
    wso_ref, bso_ref, g1_ref, beta1_ref,
    wi_ref, bi_ref,
    wo_ref, bo_ref, g2_ref, beta2_ref,
    expand_ref,                    # (H, D) 0/1 head-selection mask (f32)
    out_ref,
    *, eps,
):
    # One batch element per grid step: everything here is (S, *)-sized, fully in VMEM.
    h = h_ref[0]                   # (S, D) f32
    mask = mask_ref[0]             # (S, 1) additive mask (broadcast over heads)
    D = h.shape[-1]
    expand = expand_ref[...]

    h_bf = h.astype(_BF16)

    # ---- FastSelfAttention: fused q / k / query_att projection (one bf16 MXU matmul) ----
    fused = jnp.dot(h_bf, wqkq_ref[...], preferred_element_type=_F32) + bqkq_ref[...]
    q = fused[:, :D]               # (S, D)
    k = fused[:, D:2 * D]          # (S, D)
    qs = fused[:, 2 * D:]          # (S, H), 1/sqrt(head_size) already folded in

    # query pooling: softmax over S, then (H,S)x(S,D) MXU matmul + tiny head-mask reduce
    qw = _softmax_over_seq(qs, mask)                                        # (S, H)
    pq = lax.dot_general(qw, q, _POOL_DIMS, preferred_element_type=_F32)    # (H, D)
    pooled_q = jnp.sum(expand * pq, axis=0, keepdims=True)                  # (1, D)

    mqk = k * pooled_q                                                      # (S, D)
    mqk_bf = mqk.astype(_BF16)

    ks = jnp.dot(mqk_bf, wka_ref[...], preferred_element_type=_F32) + bka_ref[...]  # (S, H)
    kw = _softmax_over_seq(ks, mask)
    pk = lax.dot_general(kw, mqk, _POOL_DIMS, preferred_element_type=_F32)  # (H, D)
    pooled_k = jnp.sum(expand * pk, axis=0, keepdims=True)                  # (1, D)

    wv = pooled_k * q                                                       # (S, D)
    wv = jnp.dot(wv.astype(_BF16), wt_ref[...], preferred_element_type=_F32) + bt_ref[...] + q

    # ---- BertSelfOutput: dense -> (dropout skipped) -> LayerNorm(x + input) ----
    so = jnp.dot(wv.astype(_BF16), wso_ref[...], preferred_element_type=_F32) + bso_ref[...]
    attn = _layernorm_1pass(so + h, g1_ref[...], beta1_ref[...], eps)

    # ---- BertIntermediate: dense + erf-GELU ----
    inter = jnp.dot(attn.astype(_BF16), wi_ref[...], preferred_element_type=_F32) + bi_ref[...]
    inter = 0.5 * inter * (1.0 + lax.erf(inter * (1.0 / math.sqrt(2.0))))

    # ---- BertOutput: dense -> (dropout skipped) -> LayerNorm(x + attn) ----
    o = jnp.dot(inter.astype(_BF16), wo_ref[...], preferred_element_type=_F32) + bo_ref[...]
    out_ref[0] = _layernorm_1pass(o + attn, g2_ref[...], beta2_ref[...], eps)


# ----------------------------------------------------------------- wrapper ---

def _prepare_kernel_weights(params, num_heads, hidden):
    """Host-side: fuse projections, fold softmax scale, cast matmul weights to bf16."""
    head = hidden // num_heads
    scale = 1.0 / math.sqrt(head)

    w_fused = jnp.concatenate(
        [params["wq"], params["wk"], params["wqa"] * scale], axis=1)        # (D, 2D+H)
    b_fused = jnp.concatenate(
        [params["bq"], params["bk"], params["bqa"] * scale], axis=1)        # (1, 2D+H)

    # expand[h, h*head + d] = 1 : selects head h's slice of the flat hidden dim.
    expand = jnp.repeat(jnp.eye(num_heads, dtype=_F32), head, axis=1)       # (H, D)

    bf = lambda a: a.astype(_BF16)
    f = lambda a: a.astype(_F32)
    return [
        bf(w_fused), f(b_fused),
        bf(params["wka"] * scale), f(params["bka"] * scale),
        bf(params["wt"]), f(params["bt"]),
        bf(params["wso"]), f(params["bso"]), f(params["g1"]), f(params["beta1"]),
        bf(params["wi"]), f(params["bi"]),
        bf(params["wo"]), f(params["bo"]), f(params["g2"]), f(params["beta2"]),
        expand,
    ]


def fastformer_layer(hidden_states, attention_mask, params, *, num_heads, eps=1e-12):
    B, S, D = hidden_states.shape
    weights = _prepare_kernel_weights(params, num_heads, D)
    mask3 = attention_mask.reshape(B, S, 1).astype(_F32)

    def full_spec(a):
        nd = a.ndim
        return pl.BlockSpec(a.shape, lambda b, _nd=nd: (0,) * _nd)

    in_specs = [
        pl.BlockSpec((1, S, D), lambda b: (b, 0, 0)),   # hidden_states, one batch row
        pl.BlockSpec((1, S, 1), lambda b: (b, 0, 0)),   # additive attention mask
    ] + [full_spec(w) for w in weights]

    # Explicit VMEM budget: double-buffered operand blocks + headroom for temporaries.
    operand_bytes = sum(int(np.prod(w.shape)) * w.dtype.itemsize for w in weights)
    operand_bytes += 2 * S * D * 4 + S * 4              # h block + out block + mask block
    vmem_limit = int(min(max(4 * operand_bytes, 16 * 2**20), 48 * 2**20))

    kernel = functools.partial(fastformer_layer_kernel, eps=eps)

    return pl.pallas_call(
        kernel,
        out_shape=jax.ShapeDtypeStruct((B, S, D), _F32),
        grid=(B,),
        in_specs=in_specs,
        out_specs=pl.BlockSpec((1, S, D), lambda b: (b, 0, 0)),
        compiler_params=pltpu.CompilerParams(
            dimension_semantics=("parallel",),
            vmem_limit_bytes=vmem_limit,
        ),
    )(hidden_states.astype(_F32), mask3, *weights)


# --------------------------------------------------------------- reference ---

def _layernorm(x, g, b, eps):
    mu = jnp.mean(x, axis=-1, keepdims=True)
    var = jnp.mean((x - mu) ** 2, axis=-1, keepdims=True)
    return (x - mu) * lax.rsqrt(var + eps) * g + b


def fastformer_layer_ref(h, mask, p, *, num_heads, eps=1e-12):
    """Pure-JAX f32 transliteration of the PyTorch forward (head reshape path)."""
    B, S, D = h.shape
    dh = D // num_heads
    q = h @ p["wq"] + p["bq"]
    k = h @ p["wk"] + p["bk"]

    qs = (q @ p["wqa"] + p["bqa"]) / math.sqrt(dh)
    qs = jnp.transpose(qs, (0, 2, 1)) + mask[:, None, :]           # (B, H, S)
    qw = jax.nn.softmax(qs, axis=-1)[:, :, None, :]                # (B, H, 1, S)
    q_l = jnp.transpose(q.reshape(B, S, num_heads, dh), (0, 2, 1, 3))
    pooled_q = jnp.matmul(qw, q_l)                                 # (B, H, 1, dh)
    pooled_q = jnp.transpose(pooled_q, (0, 2, 1, 3)).reshape(B, 1, D)

    mqk = k * pooled_q
    ks = (mqk @ p["wka"] + p["bka"]) / math.sqrt(dh)
    ks = jnp.transpose(ks, (0, 2, 1)) + mask[:, None, :]
    kw = jax.nn.softmax(ks, axis=-1)[:, :, None, :]
    k_l = jnp.transpose(mqk.reshape(B, S, num_heads, dh), (0, 2, 1, 3))
    pooled_k = jnp.matmul(kw, k_l)                                 # (B, H, 1, dh)

    wv = pooled_k * q_l                                            # (B, H, S, dh)
    wv = jnp.transpose(wv, (0, 2, 1, 3)).reshape(B, S, D)
    wv = wv @ p["wt"] + p["bt"] + q

    attn = _layernorm(wv @ p["wso"] + p["bso"] + h, p["g1"], p["beta1"], eps)
    inter = attn @ p["wi"] + p["bi"]
    inter = 0.5 * inter * (1.0 + lax.erf(inter / math.sqrt(2.0)))
    return _layernorm(inter @ p["wo"] + p["bo"] + attn, p["g2"], p["beta2"], eps)


# ------------------------------------------------------------------- setup ---

def init_params(key, hidden, num_heads, intermediate, init_range=0.02):
    ks = jax.random.split(key, 12)

    def w(k, shape):          # weights stored as (in, out), i.e. PyTorch W.T
        return jax.random.normal(k, shape, _F32) * init_range

    def b(k, n):              # biases stored as (1, n) for TPU-friendly layout
        return jax.random.normal(k, (1, n), _F32) * init_range

    return {
        "wq":  w(ks[0], (hidden, hidden)),       "bq":  b(ks[1], hidden),
        "wk":  w(ks[2], (hidden, hidden)),       "bk":  b(ks[3], hidden),
        "wqa": w(ks[4], (hidden, num_heads)),    "bqa": b(ks[5], num_heads),
        "wka": w(ks[6], (hidden, num_heads)),    "bka": b(ks[7], num_heads),
        "wt":  w(ks[8], (hidden, hidden)),       "bt":  b(ks[9], hidden),
        "wso": w(ks[10], (hidden, hidden)),      "bso": jnp.zeros((1, hidden), _F32),
        "g1":  jnp.ones((1, hidden), _F32),      "beta1": jnp.zeros((1, hidden), _F32),
        "wi":  w(ks[11], (hidden, intermediate)),
        "bi":  jnp.zeros((1, intermediate), _F32),
        "wo":  w(jax.random.fold_in(key, 99), (intermediate, hidden)),
        "bo":  jnp.zeros((1, hidden), _F32),
        "g2":  jnp.ones((1, hidden), _F32),      "beta2": jnp.zeros((1, hidden), _F32),
    }


if __name__ == "__main__":
    B, S, D, H, I = 2, 8, 32, 4, 64   # batch, seq, hidden, heads, intermediate

    key = jax.random.PRNGKey(0)
    k_x, k_p = jax.random.split(key)

    hidden_states = jax.random.normal(k_x, (B, S, D), _F32)
    # additive mask: last two positions of batch element 1 are masked out
    attention_mask = jnp.zeros((B, S), _F32)
    attention_mask = attention_mask.at[1, -2:].set(-10000.0)

    params = init_params(k_p, D, H, I)

    out = fastformer_layer(hidden_states, attention_mask, params, num_heads=H)
    out = jax.block_until_ready(out)

    ref = fastformer_layer_ref(hidden_states, attention_mask, params, num_heads=H)
    # bf16 matmul operands + approx softmax reciprocal loosen the tolerance vs. pure f32.
    np.testing.assert_allclose(np.asarray(out), np.asarray(ref), rtol=2e-2, atol=2e-2)

    print("KERNEL_OK")
</pallas_src>

<mosaic_0001>
module attributes {stable_mosaic.version = 11 : i64} {
  func.func @fastformer_layer_kernel(%arg0: i32, %arg1: memref<1x8x32xf32, #tpu.memory_space<vmem>>, %arg2: memref<1x8x1xf32, #tpu.memory_space<vmem>>, %arg3: memref<32x68xbf16, #tpu.memory_space<vmem>>, %arg4: memref<1x68xf32, #tpu.memory_space<vmem>>, %arg5: memref<32x4xbf16, #tpu.memory_space<vmem>>, %arg6: memref<1x4xf32, #tpu.memory_space<vmem>>, %arg7: memref<32x32xbf16, #tpu.memory_space<vmem>>, %arg8: memref<1x32xf32, #tpu.memory_space<vmem>>, %arg9: memref<32x32xbf16, #tpu.memory_space<vmem>>, %arg10: memref<1x32xf32, #tpu.memory_space<vmem>>, %arg11: memref<1x32xf32, #tpu.memory_space<vmem>>, %arg12: memref<1x32xf32, #tpu.memory_space<vmem>>, %arg13: memref<32x64xbf16, #tpu.memory_space<vmem>>, %arg14: memref<1x64xf32, #tpu.memory_space<vmem>>, %arg15: memref<64x32xbf16, #tpu.memory_space<vmem>>, %arg16: memref<1x32xf32, #tpu.memory_space<vmem>>, %arg17: memref<1x32xf32, #tpu.memory_space<vmem>>, %arg18: memref<1x32xf32, #tpu.memory_space<vmem>>, %arg19: memref<4x32xf32, #tpu.memory_space<vmem>>, %arg20: memref<1x8x32xf32, #tpu.memory_space<vmem>>) attributes {dimension_semantics = [#tpu.dimension_semantics<parallel>], iteration_bounds = array<i64: 2>, scalar_prefetch = 0 : i64, scratch_operands = 0 : i64, tpu.core_type = #tpu.core_type<tc>, window_params = [{transform_indices = @transform_0, window_bounds = array<i64: 1, 8, 32>}, {transform_indices = @transform_1, window_bounds = array<i64: 1, 8, 1>}, {pipeline_mode = #tpu.pipeline_mode<synchronous>, transform_indices = @transform_2, window_bounds = array<i64: 32, 68>}, {pipeline_mode = #tpu.pipeline_mode<synchronous>, transform_indices = @transform_3, window_bounds = array<i64: 1, 68>}, {pipeline_mode = #tpu.pipeline_mode<synchronous>, transform_indices = @transform_4, window_bounds = array<i64: 32, 4>}, {pipeline_mode = #tpu.pipeline_mode<synchronous>, transform_indices = @transform_5, window_bounds = array<i64: 1, 4>}, {pipeline_mode = #tpu.pipeline_mode<synchronous>, transform_indices = @transform_6, window_bounds = array<i64: 32, 32>}, {pipeline_mode = #tpu.pipeline_mode<synchronous>, transform_indices = @transform_7, window_bounds = array<i64: 1, 32>}, {pipeline_mode = #tpu.pipeline_mode<synchronous>, transform_indices = @transform_8, window_bounds = array<i64: 32, 32>}, {pipeline_mode = #tpu.pipeline_mode<synchronous>, transform_indices = @transform_9, window_bounds = array<i64: 1, 32>}, {pipeline_mode = #tpu.pipeline_mode<synchronous>, transform_indices = @transform_10, window_bounds = array<i64: 1, 32>}, {pipeline_mode = #tpu.pipeline_mode<synchronous>, transform_indices = @transform_11, window_bounds = array<i64: 1, 32>}, {pipeline_mode = #tpu.pipeline_mode<synchronous>, transform_indices = @transform_12, window_bounds = array<i64: 32, 64>}, {pipeline_mode = #tpu.pipeline_mode<synchronous>, transform_indices = @transform_13, window_bounds = array<i64: 1, 64>}, {pipeline_mode = #tpu.pipeline_mode<synchronous>, transform_indices = @transform_14, window_bounds = array<i64: 64, 32>}, {pipeline_mode = #tpu.pipeline_mode<synchronous>, transform_indices = @transform_15, window_bounds = array<i64: 1, 32>}, {pipeline_mode = #tpu.pipeline_mode<synchronous>, transform_indices = @transform_16, window_bounds = array<i64: 1, 32>}, {pipeline_mode = #tpu.pipeline_mode<synchronous>, transform_indices = @transform_17, window_bounds = array<i64: 1, 32>}, {pipeline_mode = #tpu.pipeline_mode<synchronous>, transform_indices = @transform_18, window_bounds = array<i64: 4, 32>}, {transform_indices = @transform_19, window_bounds = array<i64: 1, 8, 32>}]} {
    %c0 = arith.constant 0 : index
    %c0_0 = arith.constant 0 : index
    %c0_1 = arith.constant 0 : index
    %0 = vector.load %arg1[%c0, %c0_0, %c0_1] : memref<1x8x32xf32, #tpu.memory_space<vmem>>, vector<1x8x32xf32>
    %1 = vector.shape_cast %0 : vector<1x8x32xf32> to vector<8x32xf32>
    %c0_2 = arith.constant 0 : index
    %c0_3 = arith.constant 0 : index
    %c0_4 = arith.constant 0 : index
    %2 = vector.load %arg2[%c0_2, %c0_3, %c0_4] : memref<1x8x1xf32, #tpu.memory_space<vmem>>, vector<1x8x1xf32>
    %3 = vector.shape_cast %2 : vector<1x8x1xf32> to vector<8x1xf32>
    %c0_5 = arith.constant 0 : index
    %c0_6 = arith.constant 0 : index
    %4 = vector.load %arg19[%c0_5, %c0_6] : memref<4x32xf32, #tpu.memory_space<vmem>>, vector<4x32xf32>
    %5 = arith.truncf %1 : vector<8x32xf32> to vector<8x32xbf16>
    %c0_7 = arith.constant 0 : index
    %c0_8 = arith.constant 0 : index
    %6 = vector.load %arg3[%c0_7, %c0_8] : memref<32x68xbf16, #tpu.memory_space<vmem>>, vector<32x68xbf16>
    %cst = arith.constant dense<0.000000e+00> : vector<8x68xf32>
    %7 = tpu.matmul %5, %6, %cst {dimension_numbers = #tpu.dot_dimension_numbers<[1], [0], [0], [1], [0, 0, 1, 1], [], []>} : vector<8x32xbf16>, vector<32x68xbf16>, vector<8x68xf32> -> vector<8x68xf32>
    %c0_9 = arith.constant 0 : index
    %c0_10 = arith.constant 0 : index
    %8 = vector.load %arg4[%c0_9, %c0_10] : memref<1x68xf32, #tpu.memory_space<vmem>>, vector<1x68xf32>
    %9 = vector.broadcast %8 : vector<1x68xf32> to vector<8x68xf32>
    %10 = arith.addf %7, %9 : vector<8x68xf32>
    %11 = vector.extract_strided_slice %10 {offsets = [0, 0], sizes = [8, 32], strides = [1, 1]} : vector<8x68xf32> to vector<8x32xf32>
    %12 = vector.extract_strided_slice %10 {offsets = [0, 32], sizes = [8, 32], strides = [1, 1]} : vector<8x68xf32> to vector<8x32xf32>
    %13 = vector.extract_strided_slice %10 {offsets = [0, 64], sizes = [8, 4], strides = [1, 1]} : vector<8x68xf32> to vector<8x4xf32>
    %14 = vector.broadcast %3 : vector<8x1xf32> to vector<8x4xf32>
    %15 = arith.addf %13, %14 : vector<8x4xf32>
    %cst_11 = arith.constant dense<0xFF800000> : vector<4xf32>
    %16 = vector.multi_reduction <maximumf>, %15, %cst_11 [0] : vector<8x4xf32> to vector<4xf32>
    %17 = vector.shape_cast %16 : vector<4xf32> to vector<1x4xf32>
    %18 = vector.broadcast %17 : vector<1x4xf32> to vector<8x4xf32>
    %19 = arith.subf %15, %18 : vector<8x4xf32>
    %20 = math.exp %19 : vector<8x4xf32>
    %cst_12 = arith.constant dense<0.000000e+00> : vector<4xf32>
    %21 = vector.multi_reduction <add>, %20, %cst_12 [0] : vector<8x4xf32> to vector<4xf32>
    %22 = vector.shape_cast %21 : vector<4xf32> to vector<1x4xf32>
    %23 = tpu.reciprocal %22 {approx = true} : vector<1x4xf32> -> vector<1x4xf32>
    %24 = vector.broadcast %23 : vector<1x4xf32> to vector<8x4xf32>
    %25 = arith.mulf %20, %24 : vector<8x4xf32>
    %cst_13 = arith.constant dense<0.000000e+00> : vector<4x32xf32>
    %26 = tpu.matmul %25, %11, %cst_13 {dimension_numbers = #tpu.dot_dimension_numbers<[0], [0], [1], [1], [0, 1, 1, 1], [], []>} : vector<8x4xf32>, vector<8x32xf32>, vector<4x32xf32> -> vector<4x32xf32>
    %27 = arith.mulf %4, %26 : vector<4x32xf32>
    %cst_14 = arith.constant dense<0.000000e+00> : vector<32xf32>
    %28 = vector.multi_reduction <add>, %27, %cst_14 [0] : vector<4x32xf32> to vector<32xf32>
    %29 = vector.shape_cast %28 : vector<32xf32> to vector<1x32xf32>
    %30 = vector.broadcast %29 : vector<1x32xf32> to vector<8x32xf32>
    %31 = arith.mulf %12, %30 : vector<8x32xf32>
    %32 = arith.truncf %31 : vector<8x32xf32> to vector<8x32xbf16>
    %c0_15 = arith.constant 0 : index
    %c0_16 = arith.constant 0 : index
    %33 = vector.load %arg5[%c0_15, %c0_16] : memref<32x4xbf16, #tpu.memory_space<vmem>>, vector<32x4xbf16>
    %cst_17 = arith.constant dense<0.000000e+00> : vector<8x4xf32>
    %34 = tpu.matmul %32, %33, %cst_17 {dimension_numbers = #tpu.dot_dimension_numbers<[1], [0], [0], [1], [0, 0, 1, 1], [], []>} : vector<8x32xbf16>, vector<32x4xbf16>, vector<8x4xf32> -> vector<8x4xf32>
    %c0_18 = arith.constant 0 : index
    %c0_19 = arith.constant 0 : index
    %35 = vector.load %arg6[%c0_18, %c0_19] : memref<1x4xf32, #tpu.memory_space<vmem>>, vector<1x4xf32>
    %36 = vector.broadcast %35 : vector<1x4xf32> to vector<8x4xf32>
    %37 = arith.addf %34, %36 : vector<8x4xf32>
    %38 = vector.broadcast %3 : vector<8x1xf32> to vector<8x4xf32>
    %39 = arith.addf %37, %38 : vector<8x4xf32>
    %cst_20 = arith.constant dense<0xFF800000> : vector<4xf32>
    %40 = vector.multi_reduction <maximumf>, %39, %cst_20 [0] : vector<8x4xf32> to vector<4xf32>
    %41 = vector.shape_cast %40 : vector<4xf32> to vector<1x4xf32>
    %42 = vector.broadcast %41 : vector<1x4xf32> to vector<8x4xf32>
    %43 = arith.subf %39, %42 : vector<8x4xf32>
    %44 = math.exp %43 : vector<8x4xf32>
    %cst_21 = arith.constant dense<0.000000e+00> : vector<4xf32>
    %45 = vector.multi_reduction <add>, %44, %cst_21 [0] : vector<8x4xf32> to vector<4xf32>
    %46 = vector.shape_cast %45 : vector<4xf32> to vector<1x4xf32>
    %47 = tpu.reciprocal %46 {approx = true} : vector<1x4xf32> -> vector<1x4xf32>
    %48 = vector.broadcast %47 : vector<1x4xf32> to vector<8x4xf32>
    %49 = arith.mulf %44, %48 : vector<8x4xf32>
    %cst_22 = arith.constant dense<0.000000e+00> : vector<4x32xf32>
    %50 = tpu.matmul %49, %31, %cst_22 {dimension_numbers = #tpu.dot_dimension_numbers<[0], [0], [1], [1], [0, 1, 1, 1], [], []>} : vector<8x4xf32>, vector<8x32xf32>, vector<4x32xf32> -> vector<4x32xf32>
    %51 = arith.mulf %4, %50 : vector<4x32xf32>
    %cst_23 = arith.constant dense<0.000000e+00> : vector<32xf32>
    %52 = vector.multi_reduction <add>, %51, %cst_23 [0] : vector<4x32xf32> to vector<32xf32>
    %53 = vector.shape_cast %52 : vector<32xf32> to vector<1x32xf32>
    %54 = vector.broadcast %53 : vector<1x32xf32> to vector<8x32xf32>
    %55 = arith.mulf %54, %11 : vector<8x32xf32>
    %56 = arith.truncf %55 : vector<8x32xf32> to vector<8x32xbf16>
    %c0_24 = arith.constant 0 : index
    %c0_25 = arith.constant 0 : index
    %57 = vector.load %arg7[%c0_24, %c0_25] : memref<32x32xbf16, #tpu.memory_space<vmem>>, vector<32x32xbf16>
    %cst_26 = arith.constant dense<0.000000e+00> : vector<8x32xf32>
    %58 = tpu.matmul %56, %57, %cst_26 {dimension_numbers = #tpu.dot_dimension_numbers<[1], [0], [0], [1], [0, 0, 1, 1], [], []>} : vector<8x32xbf16>, vector<32x32xbf16>, vector<8x32xf32> -> vector<8x32xf32>
    %c0_27 = arith.constant 0 : index
    %c0_28 = arith.constant 0 : index
    %59 = vector.load %arg8[%c0_27, %c0_28] : memref<1x32xf32, #tpu.memory_space<vmem>>, vector<1x32xf32>
    %60 = vector.broadcast %59 : vector<1x32xf32> to vector<8x32xf32>
    %61 = arith.addf %58, %60 : vector<8x32xf32>
    %62 = arith.addf %61, %11 : vector<8x32xf32>
    %63 = arith.truncf %62 : vector<8x32xf32> to vector<8x32xbf16>
    %c0_29 = arith.constant 0 : index
    %c0_30 = arith.constant 0 : index
    %64 = vector.load %arg9[%c0_29, %c0_30] : memref<32x32xbf16, #tpu.memory_space<vmem>>, vector<32x32xbf16>
    %cst_31 = arith.constant dense<0.000000e+00> : vector<8x32xf32>
    %65 = tpu.matmul %63, %64, %cst_31 {dimension_numbers = #tpu.dot_dimension_numbers<[1], [0], [0], [1], [0, 0, 1, 1], [], []>} : vector<8x32xbf16>, vector<32x32xbf16>, vector<8x32xf32> -> vector<8x32xf32>
    %c0_32 = arith.constant 0 : index
    %c0_33 = arith.constant 0 : index
    %66 = vector.load %arg10[%c0_32, %c0_33] : memref<1x32xf32, #tpu.memory_space<vmem>>, vector<1x32xf32>
    %67 = vector.broadcast %66 : vector<1x32xf32> to vector<8x32xf32>
    %68 = arith.addf %65, %67 : vector<8x32xf32>
    %69 = arith.addf %68, %1 : vector<8x32xf32>
    %c0_34 = arith.constant 0 : index
    %c0_35 = arith.constant 0 : index
    %70 = vector.load %arg11[%c0_34, %c0_35] : memref<1x32xf32, #tpu.memory_space<vmem>>, vector<1x32xf32>
    %c0_36 = arith.constant 0 : index
    %c0_37 = arith.constant 0 : index
    %71 = vector.load %arg12[%c0_36, %c0_37] : memref<1x32xf32, #tpu.memory_space<vmem>>, vector<1x32xf32>
    %cst_38 = arith.constant dense<0.000000e+00> : vector<8xf32>
    %72 = vector.multi_reduction <add>, %69, %cst_38 [1] : vector<8x32xf32> to vector<8xf32>
    %73 = vector.shape_cast %72 : vector<8xf32> to vector<8x1xf32>
    %cst_39 = arith.constant 3.200000e+01 : f32
    %74 = vector.broadcast %cst_39 : f32 to vector<8x1xf32>
    %75 = arith.divf %73, %74 : vector<8x1xf32>
    %76 = arith.mulf %69, %69 : vector<8x32xf32>
    %cst_40 = arith.constant dense<0.000000e+00> : vector<8xf32>
    %77 = vector.multi_reduction <add>, %76, %cst_40 [1] : vector<8x32xf32> to vector<8xf32>
    %78 = vector.shape_cast %77 : vector<8xf32> to vector<8x1xf32>
    %cst_41 = arith.constant 3.200000e+01 : f32
    %79 = vector.broadcast %cst_41 : f32 to vector<8x1xf32>
    %80 = arith.divf %78, %79 : vector<8x1xf32>
    %81 = arith.mulf %75, %75 : vector<8x1xf32>
    %82 = arith.subf %80, %81 : vector<8x1xf32>
    %cst_42 = arith.constant 0.000000e+00 : f32
    %83 = vector.broadcast %cst_42 : f32 to vector<8x1xf32>
    %84 = arith.maximumf %82, %83 : vector<8x1xf32>
    %85 = vector.broadcast %75 : vector<8x1xf32> to vector<8x32xf32>
    %86 = arith.subf %69, %85 : vector<8x32xf32>
    %cst_43 = arith.constant 9.99999996E-13 : f32
    %87 = vector.broadcast %cst_43 : f32 to vector<8x1xf32>
    %88 = arith.addf %84, %87 : vector<8x1xf32>
    %89 = math.rsqrt %88 : vector<8x1xf32>
    %90 = vector.broadcast %89 : vector<8x1xf32> to vector<8x32xf32>
    %91 = arith.mulf %86, %90 : vector<8x32xf32>
    %92 = vector.broadcast %70 : vector<1x32xf32> to vector<8x32xf32>
    %93 = arith.mulf %91, %92 : vector<8x32xf32>
    %94 = vector.broadcast %71 : vector<1x32xf32> to vector<8x32xf32>
    %95 = arith.addf %93, %94 : vector<8x32xf32>
    %96 = arith.truncf %95 : vector<8x32xf32> to vector<8x32xbf16>
    %c0_44 = arith.constant 0 : index
    %c0_45 = arith.constant 0 : index
    %97 = vector.load %arg13[%c0_44, %c0_45] : memref<32x64xbf16, #tpu.memory_space<vmem>>, vector<32x64xbf16>
    %cst_46 = arith.constant dense<0.000000e+00> : vector<8x64xf32>
    %98 = tpu.matmul %96, %97, %cst_46 {dimension_numbers = #tpu.dot_dimension_numbers<[1], [0], [0], [1], [0, 0, 1, 1], [], []>} : vector<8x32xbf16>, vector<32x64xbf16>, vector<8x64xf32> -> vector<8x64xf32>
    %c0_47 = arith.constant 0 : index
    %c0_48 = arith.constant 0 : index
    %99 = vector.load %arg14[%c0_47, %c0_48] : memref<1x64xf32, #tpu.memory_space<vmem>>, vector<1x64xf32>
    %100 = vector.broadcast %99 : vector<1x64xf32> to vector<8x64xf32>
    %101 = arith.addf %98, %100 : vector<8x64xf32>
    %cst_49 = arith.constant 5.000000e-01 : f32
    %102 = vector.broadcast %cst_49 : f32 to vector<8x64xf32>
    %103 = arith.mulf %102, %101 : vector<8x64xf32>
    %cst_50 = arith.constant 0.707106769 : f32
    %104 = vector.broadcast %cst_50 : f32 to vector<8x64xf32>
    %105 = arith.mulf %101, %104 : vector<8x64xf32>
    %106 = math.erf %105 : vector<8x64xf32>
    %cst_51 = arith.constant 1.000000e+00 : f32
    %107 = vector.broadcast %cst_51 : f32 to vector<8x64xf32>
    %108 = arith.addf %107, %106 : vector<8x64xf32>
    %109 = arith.mulf %103, %108 : vector<8x64xf32>
    %110 = arith.truncf %109 : vector<8x64xf32> to vector<8x64xbf16>
    %c0_52 = arith.constant 0 : index
    %c0_53 = arith.constant 0 : index
    %111 = vector.load %arg15[%c0_52, %c0_53] : memref<64x32xbf16, #tpu.memory_space<vmem>>, vector<64x32xbf16>
    %cst_54 = arith.constant dense<0.000000e+00> : vector<8x32xf32>
    %112 = tpu.matmul %110, %111, %cst_54 {dimension_numbers = #tpu.dot_dimension_numbers<[1], [0], [0], [1], [0, 0, 1, 1], [], []>} : vector<8x64xbf16>, vector<64x32xbf16>, vector<8x32xf32> -> vector<8x32xf32>
    %c0_55 = arith.constant 0 : index
    %c0_56 = arith.constant 0 : index
    %113 = vector.load %arg16[%c0_55, %c0_56] : memref<1x32xf32, #tpu.memory_space<vmem>>, vector<1x32xf32>
    %114 = vector.broadcast %113 : vector<1x32xf32> to vector<8x32xf32>
    %115 = arith.addf %112, %114 : vector<8x32xf32>
    %116 = arith.addf %115, %95 : vector<8x32xf32>
    %c0_57 = arith.constant 0 : index
    %c0_58 = arith.constant 0 : index
    %117 = vector.load %arg17[%c0_57, %c0_58] : memref<1x32xf32, #tpu.memory_space<vmem>>, vector<1x32xf32>
    %c0_59 = arith.constant 0 : index
    %c0_60 = arith.constant 0 : index
    %118 = vector.load %arg18[%c0_59, %c0_60] : memref<1x32xf32, #tpu.memory_space<vmem>>, vector<1x32xf32>
    %cst_61 = arith.constant dense<0.000000e+00> : vector<8xf32>
    %119 = vector.multi_reduction <add>, %116, %cst_61 [1] : vector<8x32xf32> to vector<8xf32>
    %120 = vector.shape_cast %119 : vector<8xf32> to vector<8x1xf32>
    %cst_62 = arith.constant 3.200000e+01 : f32
    %121 = vector.broadcast %cst_62 : f32 to vector<8x1xf32>
    %122 = arith.divf %120, %121 : vector<8x1xf32>
    %123 = arith.mulf %116, %116 : vector<8x32xf32>
    %cst_63 = arith.constant dense<0.000000e+00> : vector<8xf32>
    %124 = vector.multi_reduction <add>, %123, %cst_63 [1] : vector<8x32xf32> to vector<8xf32>
    %125 = vector.shape_cast %124 : vector<8xf32> to vector<8x1xf32>
    %cst_64 = arith.constant 3.200000e+01 : f32
    %126 = vector.broadcast %cst_64 : f32 to vector<8x1xf32>
    %127 = arith.divf %125, %126 : vector<8x1xf32>
    %128 = arith.mulf %122, %122 : vector<8x1xf32>
    %129 = arith.subf %127, %128 : vector<8x1xf32>
    %cst_65 = arith.constant 0.000000e+00 : f32
    %130 = vector.broadcast %cst_65 : f32 to vector<8x1xf32>
    %131 = arith.maximumf %129, %130 : vector<8x1xf32>
    %132 = vector.broadcast %122 : vector<8x1xf32> to vector<8x32xf32>
    %133 = arith.subf %116, %132 : vector<8x32xf32>
    %cst_66 = arith.constant 9.99999996E-13 : f32
    %134 = vector.broadcast %cst_66 : f32 to vector<8x1xf32>
    %135 = arith.addf %131, %134 : vector<8x1xf32>
    %136 = math.rsqrt %135 : vector<8x1xf32>
    %137 = vector.broadcast %136 : vector<8x1xf32> to vector<8x32xf32>
    %138 = arith.mulf %133, %137 : vector<8x32xf32>
    %139 = vector.broadcast %117 : vector<1x32xf32> to vector<8x32xf32>
    %140 = arith.mulf %138, %139 : vector<8x32xf32>
    %141 = vector.broadcast %118 : vector<1x32xf32> to vector<8x32xf32>
    %142 = arith.addf %140, %141 : vector<8x32xf32>
    %c0_67 = arith.constant 0 : index
    %c0_68 = arith.constant 0 : index
    %c0_69 = arith.constant 0 : index
    %143 = vector.load %arg20[%c0_67, %c0_68, %c0_69] : memref<1x8x32xf32, #tpu.memory_space<vmem>>, vector<1x8x32xf32>
    %144 = vector.shape_cast %143 : vector<1x8x32xf32> to vector<8x32xf32>
    %145 = vector.shape_cast %142 : vector<8x32xf32> to vector<1x8x32xf32>
    tpu.vector_store %arg20[%c0_67, %c0_68, %c0_69], %145 {strides = array<i32>} : memref<1x8x32xf32, #tpu.memory_space<vmem>>, vector<1x8x32xf32>,
    return
  }
  func.func @transform_0(%arg0: i32) -> (i32, i32, i32) {
    %c0_i32 = arith.constant 0 : i32
    %c0_i32_0 = arith.constant 0 : i32
    %c0_i32_1 = arith.constant 0 : i32
    return %arg0, %c0_i32, %c0_i32_0 : i32, i32, i32
  }
  func.func @transform_1(%arg0: i32) -> (i32, i32, i32) {
    %c0_i32 = arith.constant 0 : i32
    %c0_i32_0 = arith.constant 0 : i32
    %c0_i32_1 = arith.constant 0 : i32
    return %arg0, %c0_i32, %c0_i32_0 : i32, i32, i32
  }
  func.func @transform_2(%arg0: i32) -> (i32, i32) {
    %c0_i32 = arith.constant 0 : i32
    %c0_i32_0 = arith.constant 0 : i32
    %c0_i32_1 = arith.constant 0 : i32
    return %c0_i32, %c0_i32_0 : i32, i32
  }
  func.func @transform_3(%arg0: i32) -> (i32, i32) {
    %c0_i32 = arith.constant 0 : i32
    %c0_i32_0 = arith.constant 0 : i32
    %c0_i32_1 = arith.constant 0 : i32
    return %c0_i32, %c0_i32_0 : i32, i32
  }
  func.func @transform_4(%arg0: i32) -> (i32, i32) {
    %c0_i32 = arith.constant 0 : i32
    %c0_i32_0 = arith.constant 0 : i32
    %c0_i32_1 = arith.constant 0 : i32
    return %c0_i32, %c0_i32_0 : i32, i32
  }
  func.func @transform_5(%arg0: i32) -> (i32, i32) {
    %c0_i32 = arith.constant 0 : i32
    %c0_i32_0 = arith.constant 0 : i32
    %c0_i32_1 = arith.constant 0 : i32
    return %c0_i32, %c0_i32_0 : i32, i32
  }
  func.func @transform_6(%arg0: i32) -> (i32, i32) {
    %c0_i32 = arith.constant 0 : i32
    %c0_i32_0 = arith.constant 0 : i32
    %c0_i32_1 = arith.constant 0 : i32
    return %c0_i32, %c0_i32_0 : i32, i32
  }
  func.func @transform_7(%arg0: i32) -> (i32, i32) {
    %c0_i32 = arith.constant 0 : i32
    %c0_i32_0 = arith.constant 0 : i32
    %c0_i32_1 = arith.constant 0 : i32
    return %c0_i32, %c0_i32_0 : i32, i32
  }
  func.func @transform_8(%arg0: i32) -> (i32, i32) {
    %c0_i32 = arith.constant 0 : i32
    %c0_i32_0 = arith.constant 0 : i32
    %c0_i32_1 = arith.constant 0 : i32
    return %c0_i32, %c0_i32_0 : i32, i32
  }
  func.func @transform_9(%arg0: i32) -> (i32, i32) {
    %c0_i32 = arith.constant 0 : i32
    %c0_i32_0 = arith.constant 0 : i32
    %c0_i32_1 = arith.constant 0 : i32
    return %c0_i32, %c0_i32_0 : i32, i32
  }
  func.func @transform_10(%arg0: i32) -> (i32, i32) {
    %c0_i32 = arith.constant 0 : i32
    %c0_i32_0 = arith.constant 0 : i32
    %c0_i32_1 = arith.constant 0 : i32
    return %c0_i32, %c0_i32_0 : i32, i32
  }
  func.func @transform_11(%arg0: i32) -> (i32, i32) {
    %c0_i32 = arith.constant 0 : i32
    %c0_i32_0 = arith.constant 0 : i32
    %c0_i32_1 = arith.constant 0 : i32
    return %c0_i32, %c0_i32_0 : i32, i32
  }
  func.func @transform_12(%arg0: i32) -> (i32, i32) {
    %c0_i32 = arith.constant 0 : i32
    %c0_i32_0 = arith.constant 0 : i32
    %c0_i32_1 = arith.constant 0 : i32
    return %c0_i32, %c0_i32_0 : i32, i32
  }
  func.func @transform_13(%arg0: i32) -> (i32, i32) {
    %c0_i32 = arith.constant 0 : i32
    %c0_i32_0 = arith.constant 0 : i32
    %c0_i32_1 = arith.constant 0 : i32
    return %c0_i32, %c0_i32_0 : i32, i32
  }
  func.func @transform_14(%arg0: i32) -> (i32, i32) {
    %c0_i32 = arith.constant 0 : i32
    %c0_i32_0 = arith.constant 0 : i32
    %c0_i32_1 = arith.constant 0 : i32
    return %c0_i32, %c0_i32_0 : i32, i32
  }
  func.func @transform_15(%arg0: i32) -> (i32, i32) {
    %c0_i32 = arith.constant 0 : i32
    %c0_i32_0 = arith.constant 0 : i32
    %c0_i32_1 = arith.constant 0 : i32
    return %c0_i32, %c0_i32_0 : i32, i32
  }
  func.func @transform_16(%arg0: i32) -> (i32, i32) {
    %c0_i32 = arith.constant 0 : i32
    %c0_i32_0 = arith.constant 0 : i32
    %c0_i32_1 = arith.constant 0 : i32
    return %c0_i32, %c0_i32_0 : i32, i32
  }
  func.func @transform_17(%arg0: i32) -> (i32, i32) {
    %c0_i32 = arith.constant 0 : i32
    %c0_i32_0 = arith.constant 0 : i32
    %c0_i32_1 = arith.constant 0 : i32
    return %c0_i32, %c0_i32_0 : i32, i32
  }
  func.func @transform_18(%arg0: i32) -> (i32, i32) {
    %c0_i32 = arith.constant 0 : i32
    %c0_i32_0 = arith.constant 0 : i32
    %c0_i32_1 = arith.constant 0 : i32
    return %c0_i32, %c0_i32_0 : i32, i32
  }
  func.func @transform_19(%arg0: i32) -> (i32, i32, i32) {
    %c0_i32 = arith.constant 0 : i32
    %c0_i32_0 = arith.constant 0 : i32
    %c0_i32_1 = arith.constant 0 : i32
    return %arg0, %c0_i32, %c0_i32_0 : i32, i32, i32
  }
}

</mosaic_0001>

<llo_original>
// kernel: tpu_custom_call.1
$region0: #{tpu_custom_call.1}
  #allocation0 [shape = 'u32[]', space=smem, size = 0x4, offset = 0x4, fixed_abs, tag = 'smem constant byte address 0x4 - core index']
  #allocation1 [shape = 'u32[72,128]{1,0:T(1,128)}', space=vmem, size = 0x9000, scoped, tag = 'internal scratch']
  %s0 = inlined_call_operand.vmem [shape: f32[2,8,32], index: 0, kind: input, shape index: {}]
  %s1 = inlined_call_operand.vmem [shape: f32[2,8,1], index: 1, kind: input, shape index: {}]
  %s2 = inlined_call_operand.vmem [shape: bf16[32,68], index: 2, kind: input, shape index: {}]
  %s3 = inlined_call_operand.vmem [shape: f32[1,68], index: 3, kind: input, shape index: {}]
  %s4 = inlined_call_operand.vmem [shape: bf16[32,4], index: 4, kind: input, shape index: {}]
  %s5 = inlined_call_operand.vmem [shape: f32[1,4], index: 5, kind: input, shape index: {}]
  %s6 = inlined_call_operand.vmem [shape: bf16[32,32], index: 6, kind: input, shape index: {}]
  %s7 = inlined_call_operand.vmem [shape: f32[1,32], index: 7, kind: input, shape index: {}]
  %s8 = inlined_call_operand.vmem [shape: bf16[32,32], index: 8, kind: input, shape index: {}]
  %s9 = inlined_call_operand.vmem [shape: f32[1,32], index: 9, kind: input, shape index: {}]
  %s10 = inlined_call_operand.vmem [shape: f32[1,32], index: 10, kind: input, shape index: {}]
  %s11 = inlined_call_operand.vmem [shape: f32[1,32], index: 11, kind: input, shape index: {}]
  %s12 = inlined_call_operand.hbm [shape: bf16[32,64], index: 12, kind: input, shape index: {}]
  %s13 = inlined_call_operand.vmem [shape: f32[1,64], index: 13, kind: input, shape index: {}]
  %s14 = inlined_call_operand.vmem [shape: bf16[64,32], index: 14, kind: input, shape index: {}]
  %s15 = inlined_call_operand.vmem [shape: f32[1,32], index: 15, kind: input, shape index: {}]
  %s16 = inlined_call_operand.vmem [shape: f32[1,32], index: 16, kind: input, shape index: {}]
  %s17 = inlined_call_operand.vmem [shape: f32[1,32], index: 17, kind: input, shape index: {}]
  %s18 = inlined_call_operand.vmem [shape: f32[4,32], index: 18, kind: input, shape index: {}]
  %s19 = inlined_call_operand.hbm [shape: f32[2,8,32], index: 19, kind: output, shape index: {}]
  %s20 = sld [smem:[#allocation0]]
  $region113: #{tpu_custom_call.1} parent=0
    _
  %s22 = ssub.s32 1, %s20
  %s23 = scalar_select 0, %s22, %s20
  $region1: #{tpu_custom_call.1} parent=0
    #allocation2 [shape = 'u8[8192]{0}', space=vmem, size = 0x2000, scoped, tag = 'input window, operand 12, single buffered']
    #allocation3 [shape = 's32[2]{0}', space=sflag, size = 0x8, scoped, tag = 'scoped memory for tpu_custom_call.1']
    #allocation4 [shape = 's32[2]{0}', space=sflag, size = 0x8, scoped, tag = 'scoped memory for tpu_custom_call.1']
    #allocation5 [shape = 'u8[8192]{0}', space=vmem, size = 0x2000, scoped, tag = 'output window, operand 0']
    %24 = vsyncpa [#allocation3], 0
    %25 = vsyncpa [#allocation4], 0
    %s26 = scalar_lea.sflag [#allocation4], 1
    %27 = vsyncpa %s26, 0
    loop: start=0, step=1, limit=4
    $region2: #{tpu_custom_call.1} parent=1 // loop_pre_header
      _
    $region3: #{tpu_custom_call.1} parent=1 // loop_header
      %s29 = sphi 0, %s33
      %p30 = scmp.ge.s32.totalorder %s29, 4
      %s39 = sphi 0, %s41
      %s42 = sphi 0, %s39
      %s43 = sphi 0, %s42
      %s59 = sphi 0, %s43
      %s65 = sphi 0, %s67
      %s68 = sphi 0, %s65
      %s69 = sphi 0, %s68
      %s85 = sphi 0, %s69
      %s89 = sphi 0, %s89
      %s91 = sphi 0, %s89
      %s92 = sphi 0, %s91
      %s106 = sphi 0, %s92
      %s110 = sphi 0, %s110
      %s112 = sphi 0, %s110
      %s113 = sphi 0, %s112
      %s127 = sphi 0, %s113
      %s131 = sphi 0, %s131
      %s133 = sphi 0, %s131
      %s134 = sphi 0, %s133
      %s148 = sphi 0, %s134
      %s152 = sphi 0, %s152
      %s154 = sphi 0, %s152
      %s155 = sphi 0, %s154
      %s169 = sphi 0, %s155
      %s173 = sphi 0, %s173
      %s175 = sphi 0, %s173
      %s176 = sphi 0, %s175
      %s190 = sphi 0, %s176
      %s194 = sphi 0, %s194
      %s196 = sphi 0, %s194
      %s197 = sphi 0, %s196
      %s211 = sphi 0, %s197
      %s215 = sphi 0, %s215
      %s217 = sphi 0, %s215
      %s218 = sphi 0, %s217
      %s232 = sphi 0, %s218
      %s236 = sphi 0, %s236
      %s238 = sphi 0, %s236
      %s239 = sphi 0, %s238
      %s253 = sphi 0, %s239
      %s257 = sphi 0, %s257
      %s259 = sphi 0, %s257
      %s260 = sphi 0, %s259
      %s274 = sphi 0, %s260
      %s278 = sphi 0, %s278
      %s280 = sphi 0, %s278
      %s281 = sphi 0, %s280
      %s295 = sphi 0, %s281
      %s299 = sphi 0, %s299
      %s301 = sphi 0, %s299
      %s302 = sphi 0, %s301
      %s316 = sphi 0, %s302
      %s320 = sphi 0, %s320
      %s322 = sphi 0, %s320
      %s323 = sphi 0, %s322
      %s337 = sphi 0, %s323
      %s341 = sphi 0, %s341
      %s343 = sphi 0, %s341
      %s344 = sphi 0, %s343
      %s358 = sphi 0, %s344
      %s362 = sphi 0, %s362
      %s364 = sphi 0, %s362
      %s365 = sphi 0, %s364
      %s379 = sphi 0, %s365
      %s383 = sphi 0, %s383
      %s385 = sphi 0, %s383
      %s386 = sphi 0, %s385
      %s400 = sphi 0, %s386
      %s404 = sphi 0, %s404
      %s406 = sphi 0, %s404
      %s407 = sphi 0, %s406
      %s421 = sphi 0, %s407
      %s425 = sphi 0, %s425
      %s427 = sphi 0, %s425
      %s428 = sphi 0, %s427
      %s442 = sphi 0, %s428
      %s448 = sphi 0, %s450
      %s451 = sphi 0, %s448
      %s452 = sphi 0, %s451
      %s468 = sphi 0, %s452
    $region4: #{tpu_custom_call.1} parent=1 // loop_header_branch
      %32 = sbr.rel (%p30) target = $region8
    $region5: #{tpu_custom_call.1} parent=1 // loop_body
      %s34 = ssub.s32 %s29, 1
      %s35 = ssub.s32 %s29, 2
      %s36 = sadd.s32 %s29, 1
      %s37 = ssub.s32 %s29, %s36
      %p38 = scmp.eq.s32.totalorder %s37, 0
      %s40 = sadd.s32 %s39, 1
      %s41 = scalar_select %p38, %s39, %s40
      %p44 = pneg %p38
      %p45 = scmp.eq.s32.totalorder %s29, 1
      %p46 = por %p44, %p45
      %p47 = scmp.ne.s32.totalorder %s39, %s42
      %p48 = scmp.eq.s32.totalorder %s29, 0
      %p49 = por %p47, %p48
      %p50 = scmp.ne.s32.totalorder %s39, %s42
      %p51 = scmp.eq.s32.totalorder %s34, 1
      %p52 = por %p50, %p51
      %p53 = scmp.ne.s32.totalorder %s42, %s43
      %p54 = scmp.eq.s32.totalorder %s34, 0
      %p55 = por %p53, %p54
      %p56 = scmp.ne.s32.totalorder %s42, %s43
      %p57 = scmp.eq.s32.totalorder %s35, 1
      %p58 = por %p56, %p57
      %p60 = scmp.ne.s32.totalorder %s43, %s59
      %p61 = scmp.eq.s32.totalorder %s35, 0
      %p62 = por %p60, %p61
      %s63 = ssub.s32 %s29, %s36
      %p64 = scmp.eq.s32.totalorder %s63, 0
      %s66 = sadd.s32 %s65, 1
      %s67 = scalar_select %p64, %s65, %s66
      %p70 = pneg %p64
      %p71 = scmp.eq.s32.totalorder %s29, 1
      %p72 = por %p70, %p71
      %p73 = scmp.ne.s32.totalorder %s65, %s68
      %p74 = scmp.eq.s32.totalorder %s29, 0
      %p75 = por %p73, %p74
      %p76 = scmp.ne.s32.totalorder %s65, %s68
      %p77 = scmp.eq.s32.totalorder %s34, 1
      %p78 = por %p76, %p77
      %p79 = scmp.ne.s32.totalorder %s68, %s69
      %p80 = scmp.eq.s32.totalorder %s34, 0
      %p81 = por %p79, %p80
      %p82 = scmp.ne.s32.totalorder %s68, %s69
      %p83 = scmp.eq.s32.totalorder %s35, 1
      %p84 = por %p82, %p83
      %p86 = scmp.ne.s32.totalorder %s69, %s85
      %p87 = scmp.eq.s32.totalorder %s35, 0
      %p88 = por %p86, %p87
      %s90 = sadd.s32 %s89, 1
      %p93 = scmp.eq.s32.totalorder %s29, 1
      %p94 = scmp.ne.s32.totalorder %s89, %s91
      %p95 = scmp.eq.s32.totalorder %s29, 0
      %p96 = por %p94, %p95
      %p97 = scmp.ne.s32.totalorder %s89, %s91
      %p98 = scmp.eq.s32.totalorder %s34, 1
      %p99 = por %p97, %p98
      %p100 = scmp.ne.s32.totalorder %s91, %s92
      %p101 = scmp.eq.s32.totalorder %s34, 0
      %p102 = por %p100, %p101
      %p103 = scmp.ne.s32.totalorder %s91, %s92
      %p104 = scmp.eq.s32.totalorder %s35, 1
      %p105 = por %p103, %p104
      %p107 = scmp.ne.s32.totalorder %s92, %s106
      %p108 = scmp.eq.s32.totalorder %s35, 0
      %p109 = por %p107, %p108
      %s111 = sadd.s32 %s110, 1
      %p114 = scmp.eq.s32.totalorder %s29, 1
      %p115 = scmp.ne.s32.totalorder %s110, %s112
      %p116 = scmp.eq.s32.totalorder %s29, 0
      %p117 = por %p115, %p116
      %p118 = scmp.ne.s32.totalorder %s110, %s112
      %p119 = scmp.eq.s32.totalorder %s34, 1
      %p120 = por %p118, %p119
      %p121 = scmp.ne.s32.totalorder %s112, %s113
      %p122 = scmp.eq.s32.totalorder %s34, 0
      %p123 = por %p121, %p122
      %p124 = scmp.ne.s32.totalorder %s112, %s113
      %p125 = scmp.eq.s32.totalorder %s35, 1
      %p126 = por %p124, %p125
      %p128 = scmp.ne.s32.totalorder %s113, %s127
      %p129 = scmp.eq.s32.totalorder %s35, 0
      %p130 = por %p128, %p129
      %s132 = sadd.s32 %s131, 1
      %p135 = scmp.eq.s32.totalorder %s29, 1
      %p136 = scmp.ne.s32.totalorder %s131, %s133
      %p137 = scmp.eq.s32.totalorder %s29, 0
      %p138 = por %p136, %p137
      %p139 = scmp.ne.s32.totalorder %s131, %s133
      %p140 = scmp.eq.s32.totalorder %s34, 1
      %p141 = por %p139, %p140
      %p142 = scmp.ne.s32.totalorder %s133, %s134
      %p143 = scmp.eq.s32.totalorder %s34, 0
      %p144 = por %p142, %p143
      %p145 = scmp.ne.s32.totalorder %s133, %s134
      %p146 = scmp.eq.s32.totalorder %s35, 1
      %p147 = por %p145, %p146
      %p149 = scmp.ne.s32.totalorder %s134, %s148
      %p150 = scmp.eq.s32.totalorder %s35, 0
      %p151 = por %p149, %p150
      %s153 = sadd.s32 %s152, 1
      %p156 = scmp.eq.s32.totalorder %s29, 1
      %p157 = scmp.ne.s32.totalorder %s152, %s154
      %p158 = scmp.eq.s32.totalorder %s29, 0
      %p159 = por %p157, %p158
      %p160 = scmp.ne.s32.totalorder %s152, %s154
      %p161 = scmp.eq.s32.totalorder %s34, 1
      %p162 = por %p160, %p161
      %p163 = scmp.ne.s32.totalorder %s154, %s155
      %p164 = scmp.eq.s32.totalorder %s34, 0
      %p165 = por %p163, %p164
      %p166 = scmp.ne.s32.totalorder %s154, %s155
      %p167 = scmp.eq.s32.totalorder %s35, 1
      %p168 = por %p166, %p167
      %p170 = scmp.ne.s32.totalorder %s155, %s169
      %p171 = scmp.eq.s32.totalorder %s35, 0
      %p172 = por %p170, %p171
      %s174 = sadd.s32 %s173, 1
      %p177 = scmp.eq.s32.totalorder %s29, 1
      %p178 = scmp.ne.s32.totalorder %s173, %s175
      %p179 = scmp.eq.s32.totalorder %s29, 0
      %p180 = por %p178, %p179
      %p181 = scmp.ne.s32.totalorder %s173, %s175
      %p182 = scmp.eq.s32.totalorder %s34, 1
      %p183 = por %p181, %p182
      %p184 = scmp.ne.s32.totalorder %s175, %s176
      %p185 = scmp.eq.s32.totalorder %s34, 0
      %p186 = por %p184, %p185
      %p187 = scmp.ne.s32.totalorder %s175, %s176
      %p188 = scmp.eq.s32.totalorder %s35, 1
      %p189 = por %p187, %p188
      %p191 = scmp.ne.s32.totalorder %s176, %s190
      %p192 = scmp.eq.s32.totalorder %s35, 0
      %p193 = por %p191, %p192
      %s195 = sadd.s32 %s194, 1
      %p198 = scmp.eq.s32.totalorder %s29, 1
      %p199 = scmp.ne.s32.totalorder %s194, %s196
      %p200 = scmp.eq.s32.totalorder %s29, 0
      %p201 = por %p199, %p200
      %p202 = scmp.ne.s32.totalorder %s194, %s196
      %p203 = scmp.eq.s32.totalorder %s34, 1
      %p204 = por %p202, %p203
      %p205 = scmp.ne.s32.totalorder %s196, %s197
      %p206 = scmp.eq.s32.totalorder %s34, 0
      %p207 = por %p205, %p206
      %p208 = scmp.ne.s32.totalorder %s196, %s197
      %p209 = scmp.eq.s32.totalorder %s35, 1
      %p210 = por %p208, %p209
      %p212 = scmp.ne.s32.totalorder %s197, %s211
      %p213 = scmp.eq.s32.totalorder %s35, 0
      %p214 = por %p212, %p213
      %s216 = sadd.s32 %s215, 1
      %p219 = scmp.eq.s32.totalorder %s29, 1
      %p220 = scmp.ne.s32.totalorder %s215, %s217
      %p221 = scmp.eq.s32.totalorder %s29, 0
      %p222 = por %p220, %p221
      %p223 = scmp.ne.s32.totalorder %s215, %s217
      %p224 = scmp.eq.s32.totalorder %s34, 1
      %p225 = por %p223, %p224
      %p226 = scmp.ne.s32.totalorder %s217, %s218
      %p227 = scmp.eq.s32.totalorder %s34, 0
      %p228 = por %p226, %p227
      %p229 = scmp.ne.s32.totalorder %s217, %s218
      %p230 = scmp.eq.s32.totalorder %s35, 1
      %p231 = por %p229, %p230
      %p233 = scmp.ne.s32.totalorder %s218, %s232
      %p234 = scmp.eq.s32.totalorder %s35, 0
      %p235 = por %p233, %p234
      %s237 = sadd.s32 %s236, 1
      %p240 = scmp.eq.s32.totalorder %s29, 1
      %p241 = scmp.ne.s32.totalorder %s236, %s238
      %p242 = scmp.eq.s32.totalorder %s29, 0
      %p243 = por %p241, %p242
      %p244 = scmp.ne.s32.totalorder %s236, %s238
      %p245 = scmp.eq.s32.totalorder %s34, 1
      %p246 = por %p244, %p245
      %p247 = scmp.ne.s32.totalorder %s238, %s239
      %p248 = scmp.eq.s32.totalorder %s34, 0
      %p249 = por %p247, %p248
      %p250 = scmp.ne.s32.totalorder %s238, %s239
      %p251 = scmp.eq.s32.totalorder %s35, 1
      %p252 = por %p250, %p251
      %p254 = scmp.ne.s32.totalorder %s239, %s253
      %p255 = scmp.eq.s32.totalorder %s35, 0
      %p256 = por %p254, %p255
      %s258 = sadd.s32 %s257, 1
      %p261 = scmp.eq.s32.totalorder %s29, 1
      %p262 = scmp.ne.s32.totalorder %s257, %s259
      %p263 = scmp.eq.s32.totalorder %s29, 0
      %p264 = por %p262, %p263
      %p265 = scmp.ne.s32.totalorder %s257, %s259
      %p266 = scmp.eq.s32.totalorder %s34, 1
      %p267 = por %p265, %p266
      %p268 = scmp.ne.s32.totalorder %s259, %s260
      %p269 = scmp.eq.s32.totalorder %s34, 0
      %p270 = por %p268, %p269
      %p271 = scmp.ne.s32.totalorder %s259, %s260
      %p272 = scmp.eq.s32.totalorder %s35, 1
      %p273 = por %p271, %p272
      %p275 = scmp.ne.s32.totalorder %s260, %s274
      %p276 = scmp.eq.s32.totalorder %s35, 0
      %p277 = por %p275, %p276
      %s279 = sadd.s32 %s278, 1
      %p282 = scmp.eq.s32.totalorder %s29, 1
      %p283 = scmp.ne.s32.totalorder %s278, %s280
      %p284 = scmp.eq.s32.totalorder %s29, 0
      %p285 = por %p283, %p284
      %p286 = scmp.ne.s32.totalorder %s278, %s280
      %p287 = scmp.eq.s32.totalorder %s34, 1
      %p288 = por %p286, %p287
      %p289 = scmp.ne.s32.totalorder %s280, %s281
      %p290 = scmp.eq.s32.totalorder %s34, 0
      %p291 = por %p289, %p290
      %p292 = scmp.ne.s32.totalorder %s280, %s281
      %p293 = scmp.eq.s32.totalorder %s35, 1
      %p294 = por %p292, %p293
      %p296 = scmp.ne.s32.totalorder %s281, %s295
      %p297 = scmp.eq.s32.totalorder %s35, 0
      %p298 = por %p296, %p297
      %s300 = sadd.s32 %s299, 1
      %p303 = scmp.eq.s32.totalorder %s29, 1
      %p304 = scmp.ne.s32.totalorder %s299, %s301
      %p305 = scmp.eq.s32.totalorder %s29, 0
      %p306 = por %p304, %p305
      %p307 = scmp.ne.s32.totalorder %s299, %s301
      %p308 = scmp.eq.s32.totalorder %s34, 1
      %p309 = por %p307, %p308
      %p310 = scmp.ne.s32.totalorder %s301, %s302
      %p311 = scmp.eq.s32.totalorder %s34, 0
      %p312 = por %p310, %p311
      %p313 = scmp.ne.s32.totalorder %s301, %s302
      %p314 = scmp.eq.s32.totalorder %s35, 1
      %p315 = por %p313, %p314
      %p317 = scmp.ne.s32.totalorder %s302, %s316
      %p318 = scmp.eq.s32.totalorder %s35, 0
      %p319 = por %p317, %p318
      %s321 = sadd.s32 %s320, 1
      %p324 = scmp.eq.s32.totalorder %s29, 1
      %p325 = scmp.ne.s32.totalorder %s320, %s322
      %p326 = scmp.eq.s32.totalorder %s29, 0
      %p327 = por %p325, %p326
      %p328 = scmp.ne.s32.totalorder %s320, %s322
      %p329 = scmp.eq.s32.totalorder %s34, 1
      %p330 = por %p328, %p329
      %p331 = scmp.ne.s32.totalorder %s322, %s323
      %p332 = scmp.eq.s32.totalorder %s34, 0
      %p333 = por %p331, %p332
      %p334 = scmp.ne.s32.totalorder %s322, %s323
      %p335 = scmp.eq.s32.totalorder %s35, 1
      %p336 = por %p334, %p335
      %p338 = scmp.ne.s32.totalorder %s323, %s337
      %p339 = scmp.eq.s32.totalorder %s35, 0
      %p340 = por %p338, %p339
      %s342 = sadd.s32 %s341, 1
      %p345 = scmp.eq.s32.totalorder %s29, 1
      %p346 = scmp.ne.s32.totalorder %s341, %s343
      %p347 = scmp.eq.s32.totalorder %s29, 0
      %p348 = por %p346, %p347
      %p349 = scmp.ne.s32.totalorder %s341, %s343
      %p350 = scmp.eq.s32.totalorder %s34, 1
      %p351 = por %p349, %p350
      %p352 = scmp.ne.s32.totalorder %s343, %s344
      %p353 = scmp.eq.s32.totalorder %s34, 0
      %p354 = por %p352, %p353
      %p355 = scmp.ne.s32.totalorder %s343, %s344
      %p356 = scmp.eq.s32.totalorder %s35, 1
      %p357 = por %p355, %p356
      %p359 = scmp.ne.s32.totalorder %s344, %s358
      %p360 = scmp.eq.s32.totalorder %s35, 0
      %p361 = por %p359, %p360
      %s363 = sadd.s32 %s362, 1
      %p366 = scmp.eq.s32.totalorder %s29, 1
      %p367 = scmp.ne.s32.totalorder %s362, %s364
      %p368 = scmp.eq.s32.totalorder %s29, 0
      %p369 = por %p367, %p368
      %p370 = scmp.ne.s32.totalorder %s362, %s364
      %p371 = scmp.eq.s32.totalorder %s34, 1
      %p372 = por %p370, %p371
      %p373 = scmp.ne.s32.totalorder %s364, %s365
      %p374 = scmp.eq.s32.totalorder %s34, 0
      %p375 = por %p373, %p374
      %p376 = scmp.ne.s32.totalorder %s364, %s365
      %p377 = scmp.eq.s32.totalorder %s35, 1
      %p378 = por %p376, %p377
      %p380 = scmp.ne.s32.totalorder %s365, %s379
      %p381 = scmp.eq.s32.totalorder %s35, 0
      %p382 = por %p380, %p381
      %s384 = sadd.s32 %s383, 1
      %p387 = scmp.eq.s32.totalorder %s29, 1
      %p388 = scmp.ne.s32.totalorder %s383, %s385
      %p389 = scmp.eq.s32.totalorder %s29, 0
      %p390 = por %p388, %p389
      %p391 = scmp.ne.s32.totalorder %s383, %s385
      %p392 = scmp.eq.s32.totalorder %s34, 1
      %p393 = por %p391, %p392
      %p394 = scmp.ne.s32.totalorder %s385, %s386
      %p395 = scmp.eq.s32.totalorder %s34, 0
      %p396 = por %p394, %p395
      %p397 = scmp.ne.s32.totalorder %s385, %s386
      %p398 = scmp.eq.s32.totalorder %s35, 1
      %p399 = por %p397, %p398
      %p401 = scmp.ne.s32.totalorder %s386, %s400
      %p402 = scmp.eq.s32.totalorder %s35, 0
      %p403 = por %p401, %p402
      %s405 = sadd.s32 %s404, 1
      %p408 = scmp.eq.s32.totalorder %s29, 1
      %p409 = scmp.ne.s32.totalorder %s404, %s406
      %p410 = scmp.eq.s32.totalorder %s29, 0
      %p411 = por %p409, %p410
      %p412 = scmp.ne.s32.totalorder %s404, %s406
      %p413 = scmp.eq.s32.totalorder %s34, 1
      %p414 = por %p412, %p413
      %p415 = scmp.ne.s32.totalorder %s406, %s407
      %p416 = scmp.eq.s32.totalorder %s34, 0
      %p417 = por %p415, %p416
      %p418 = scmp.ne.s32.totalorder %s406, %s407
      %p419 = scmp.eq.s32.totalorder %s35, 1
      %p420 = por %p418, %p419
      %p422 = scmp.ne.s32.totalorder %s407, %s421
      %p423 = scmp.eq.s32.totalorder %s35, 0
      %p424 = por %p422, %p423
      %s426 = sadd.s32 %s425, 1
      %p429 = scmp.eq.s32.totalorder %s29, 1
      %p430 = scmp.ne.s32.totalorder %s425, %s427
      %p431 = scmp.eq.s32.totalorder %s29, 0
      %p432 = por %p430, %p431
      %p433 = scmp.ne.s32.totalorder %s425, %s427
      %p434 = scmp.eq.s32.totalorder %s34, 1
      %p435 = por %p433, %p434
      %p436 = scmp.ne.s32.totalorder %s427, %s428
      %p437 = scmp.eq.s32.totalorder %s34, 0
      %p438 = por %p436, %p437
      %p439 = scmp.ne.s32.totalorder %s427, %s428
      %p440 = scmp.eq.s32.totalorder %s35, 1
      %p441 = por %p439, %p440
      %p443 = scmp.ne.s32.totalorder %s428, %s442
      %p444 = scmp.eq.s32.totalorder %s35, 0
      %p445 = por %p443, %p444
      %s446 = ssub.s32 %s29, %s36
      %p447 = scmp.eq.s32.totalorder %s446, 0
      %s449 = sadd.s32 %s448, 1
      %s450 = scalar_select %p447, %s448, %s449
      %p453 = pneg %p447
      %p454 = scmp.eq.s32.totalorder %s29, 1
      %p455 = por %p453, %p454
      %p456 = scmp.ne.s32.totalorder %s448, %s451
      %p457 = scmp.eq.s32.totalorder %s29, 0
      %p458 = por %p456, %p457
      %p459 = scmp.ne.s32.totalorder %s448, %s451
      %p460 = scmp.eq.s32.totalorder %s34, 1
      %p461 = por %p459, %p460
      %p462 = scmp.ne.s32.totalorder %s451, %s452
      %p463 = scmp.eq.s32.totalorder %s34, 0
      %p464 = por %p462, %p463
      %p465 = scmp.ne.s32.totalorder %s451, %s452
      %p466 = scmp.eq.s32.totalorder %s35, 1
      %p467 = por %p465, %p466
      %p469 = scmp.ne.s32.totalorder %s452, %s468
      %p470 = scmp.eq.s32.totalorder %s35, 0
      %p471 = por %p469, %p470
      %p472 = scmp.le.s32.totalorder 1, %s29
      %p473 = scmp.lt.s32.totalorder %s29, 3
      %p474 = pnand %p472, %p473
      %p475 = pneg %p474
      // Predicated region
      $region9: #{tpu_custom_call.1} parent=5 // pred_check
        _
      $region10: #{tpu_custom_call.1} parent=5 // pred_check_branch
        %477 = sbr.rel (%p474) target = $region12
      $region11: #{tpu_custom_call.1} parent=5 // pred_region
        %s478 = ssub.s32 %s29, 1
        // Predicated region
        $region13: #{tpu_custom_call.1} parent=11 // pred_check
          %p479 = pneg %p102
        $region14: #{tpu_custom_call.1} parent=11 // pred_check_branch
          %481 = sbr.rel (%p479) target = $region16
        $region15: #{tpu_custom_call.1} parent=11 // pred_region
          _
        $region16: #{tpu_custom_call.1} parent=11 // pred_fallthru
          _
        // Predicated region
        $region17: #{tpu_custom_call.1} parent=11 // pred_check
          %p482 = pneg %p123
        $region18: #{tpu_custom_call.1} parent=11 // pred_check_branch
          %484 = sbr.rel (%p482) target = $region20
        $region19: #{tpu_custom_call.1} parent=11 // pred_region
          _
        $region20: #{tpu_custom_call.1} parent=11 // pred_fallthru
          _
        // Predicated region
        $region21: #{tpu_custom_call.1} parent=11 // pred_check
          %p485 = pneg %p144
        $region22: #{tpu_custom_call.1} parent=11 // pred_check_branch
          %487 = sbr.rel (%p485) target = $region24
        $region23: #{tpu_custom_call.1} parent=11 // pred_region
          _
        $region24: #{tpu_custom_call.1} parent=11 // pred_fallthru
          _
        // Predicated region
        $region25: #{tpu_custom_call.1} parent=11 // pred_check
          %p488 = pneg %p165
        $region26: #{tpu_custom_call.1} parent=11 // pred_check_branch
          %490 = sbr.rel (%p488) target = $region28
        $region27: #{tpu_custom_call.1} parent=11 // pred_region
          _
        $region28: #{tpu_custom_call.1} parent=11 // pred_fallthru
          _
        // Predicated region
        $region29: #{tpu_custom_call.1} parent=11 // pred_check
          %p491 = pneg %p186
        $region30: #{tpu_custom_call.1} parent=11 // pred_check_branch
          %493 = sbr.rel (%p491) target = $region32
        $region31: #{tpu_custom_call.1} parent=11 // pred_region
          _
        $region32: #{tpu_custom_call.1} parent=11 // pred_fallthru
          _
        // Predicated region
        $region33: #{tpu_custom_call.1} parent=11 // pred_check
          %p494 = pneg %p207
        $region34: #{tpu_custom_call.1} parent=11 // pred_check_branch
          %496 = sbr.rel (%p494) target = $region36
        $region35: #{tpu_custom_call.1} parent=11 // pred_region
          _
        $region36: #{tpu_custom_call.1} parent=11 // pred_fallthru
          _
        // Predicated region
        $region37: #{tpu_custom_call.1} parent=11 // pred_check
          %p497 = pneg %p228
        $region38: #{tpu_custom_call.1} parent=11 // pred_check_branch
          %499 = sbr.rel (%p497) target = $region40
        $region39: #{tpu_custom_call.1} parent=11 // pred_region
          _
        $region40: #{tpu_custom_call.1} parent=11 // pred_fallthru
          _
        // Predicated region
        $region41: #{tpu_custom_call.1} parent=11 // pred_check
          %p500 = pneg %p249
        $region42: #{tpu_custom_call.1} parent=11 // pred_check_branch
          %502 = sbr.rel (%p500) target = $region44
        $region43: #{tpu_custom_call.1} parent=11 // pred_region
          _
        $region44: #{tpu_custom_call.1} parent=11 // pred_fallthru
          _
        // Predicated region
        $region45: #{tpu_custom_call.1} parent=11 // pred_check
          %p503 = pneg %p270
        $region46: #{tpu_custom_call.1} parent=11 // pred_check_branch
          %505 = sbr.rel (%p503) target = $region48
        $region47: #{tpu_custom_call.1} parent=11 // pred_region
          _
        $region48: #{tpu_custom_call.1} parent=11 // pred_fallthru
          _
        // Predicated region
        $region49: #{tpu_custom_call.1} parent=11 // pred_check
          %p506 = pneg %p291
        $region50: #{tpu_custom_call.1} parent=11 // pred_check_branch
          %508 = sbr.rel (%p506) target = $region52
        $region51: #{tpu_custom_call.1} parent=11 // pred_region
          _
        $region52: #{tpu_custom_call.1} parent=11 // pred_fallthru
          _
        // Predicated region
        $region53: #{tpu_custom_call.1} parent=11 // pred_check
          %p509 = pneg %p312
        $region54: #{tpu_custom_call.1} parent=11 // pred_check_branch
          %511 = sbr.rel (%p509) target = $region56
        $region55: #{tpu_custom_call.1} parent=11 // pred_region
          %513 = vsyncadd [#allocation3], 0
          %s514 = sshll.u32 %s12, 4
          %s515 = int_to_ptr.hbm [resolvable:$true] %s514
          %s516 = sshll.u32 [#allocation2], 4
          %s517 = int_to_ptr.vmem [resolvable:$true] %s516
          %522 = dma.hbm_to_vmem [thread:$0]  %s515, 256, %s517, [#allocation3], 64, 64, 4
        $region56: #{tpu_custom_call.1} parent=11 // pred_fallthru
          _
        // Predicated region
        $region57: #{tpu_custom_call.1} parent=11 // pred_check
          %p523 = pneg %p333
        $region58: #{tpu_custom_call.1} parent=11 // pred_check_branch
          %525 = sbr.rel (%p523) target = $region60
        $region59: #{tpu_custom_call.1} parent=11 // pred_region
          _
        $region60: #{tpu_custom_call.1} parent=11 // pred_fallthru
          _
        // Predicated region
        $region61: #{tpu_custom_call.1} parent=11 // pred_check
          %p526 = pneg %p354
        $region62: #{tpu_custom_call.1} parent=11 // pred_check_branch
          %528 = sbr.rel (%p526) target = $region64
        $region63: #{tpu_custom_call.1} parent=11 // pred_region
          _
        $region64: #{tpu_custom_call.1} parent=11 // pred_fallthru
          _
        // Predicated region
        $region65: #{tpu_custom_call.1} parent=11 // pred_check
          %p529 = pneg %p375
        $region66: #{tpu_custom_call.1} parent=11 // pred_check_branch
          %531 = sbr.rel (%p529) target = $region68
        $region67: #{tpu_custom_call.1} parent=11 // pred_region
          _
        $region68: #{tpu_custom_call.1} parent=11 // pred_fallthru
          _
        // Predicated region
        $region69: #{tpu_custom_call.1} parent=11 // pred_check
          %p532 = pneg %p396
        $region70: #{tpu_custom_call.1} parent=11 // pred_check_branch
          %534 = sbr.rel (%p532) target = $region72
        $region71: #{tpu_custom_call.1} parent=11 // pred_region
          _
        $region72: #{tpu_custom_call.1} parent=11 // pred_fallthru
          _
        // Predicated region
        $region73: #{tpu_custom_call.1} parent=11 // pred_check
          %p535 = pneg %p417
        $region74: #{tpu_custom_call.1} parent=11 // pred_check_branch
          %537 = sbr.rel (%p535) target = $region76
        $region75: #{tpu_custom_call.1} parent=11 // pred_region
          _
        $region76: #{tpu_custom_call.1} parent=11 // pred_fallthru
          _
        // Predicated region
        $region77: #{tpu_custom_call.1} parent=11 // pred_check
          %p538 = pneg %p438
        $region78: #{tpu_custom_call.1} parent=11 // pred_check_branch
          %540 = sbr.rel (%p538) target = $region80
        $region79: #{tpu_custom_call.1} parent=11 // pred_region
          _
        $region80: #{tpu_custom_call.1} parent=11 // pred_fallthru
          _
      $region12: #{tpu_custom_call.1} parent=5 // pred_fallthru
        _
      %p541 = scmp.lt.s32.totalorder %s29, 2
      // Predicated region
      $region81: #{tpu_custom_call.1} parent=5 // pred_check
        %p542 = pneg %p541
      $region82: #{tpu_custom_call.1} parent=5 // pred_check_branch
        %544 = sbr.rel (%p542) target = $region84
      $region83: #{tpu_custom_call.1} parent=5 // pred_region
        // Predicated region
        $region85: #{tpu_custom_call.1} parent=83 // pred_check
          %p545 = pneg %p49
        $region86: #{tpu_custom_call.1} parent=83 // pred_check_branch
          %547 = sbr.rel (%p545) target = $region88
        $region87: #{tpu_custom_call.1} parent=83 // pred_region
          %p548 = scmp.lt.s32.totalorder %s29, 1
          %s549 = scalar_select %p548, %s29, 1
          %s550 = smul.addr %s549, 8
          %s551 = scalar_lea.vmem %s0, %s550
        $region88: #{tpu_custom_call.1} parent=83 // pred_fallthru
          _
        // Predicated region
        $region89: #{tpu_custom_call.1} parent=83 // pred_check
          %p552 = pneg %p75
        $region90: #{tpu_custom_call.1} parent=83 // pred_check_branch
          %554 = sbr.rel (%p552) target = $region92
        $region91: #{tpu_custom_call.1} parent=83 // pred_region
          %p555 = scmp.lt.s32.totalorder %s29, 1
          %s556 = scalar_select %p555, %s29, 1
          %s557 = smul.addr %s556, 8
          %s558 = scalar_lea.vmem %s1, %s557
        $region92: #{tpu_custom_call.1} parent=83 // pred_fallthru
          _
      $region84: #{tpu_custom_call.1} parent=5 // pred_fallthru
        _
      %p559 = scmp.le.s32.totalorder 1, %s29
      %p560 = scmp.lt.s32.totalorder %s29, 3
      %p561 = pnand %p559, %p560
      %p562 = pneg %p561
      // Predicated region
      $region93: #{tpu_custom_call.1} parent=5 // pred_check
        _
      $region94: #{tpu_custom_call.1} parent=5 // pred_check_branch
        %564 = sbr.rel (%p561) target = $region96
      $region95: #{tpu_custom_call.1} parent=5 // pred_region
        %s565 = ssub.s32 %s29, 1
        // Predicated region
        $region97: #{tpu_custom_call.1} parent=95 // pred_check
          %p566 = pneg %p312
        $region98: #{tpu_custom_call.1} parent=95 // pred_check_branch
          %568 = sbr.rel (%p566) target = $region100
        $region99: #{tpu_custom_call.1} parent=95 // pred_region
          %570 = dma.done [#allocation3], 256
        $region100: #{tpu_custom_call.1} parent=95 // pred_fallthru
          _
        %p571 = scmp.lt.s32.totalorder %s34, 1
        %s572 = scalar_select %p571, %s34, 1
        %s573 = smul.addr %s572, 8
        %s574 = scalar_lea.vmem %s0, %s573
        %p575 = pneg %p55
        %p576 = pneg %p52
        %p577 = scmp.lt.s32.totalorder %s34, 1
        %s578 = scalar_select %p577, %s34, 1
        %s579 = smul.addr %s578, 8
        %s580 = scalar_lea.vmem %s1, %s579
        %p581 = pneg %p81
        %p582 = pneg %p78
        %p583 = pneg %p102
        %p584 = pneg %p99
        %p585 = pneg %p123
        %p586 = pneg %p120
        %p587 = pneg %p144
        %p588 = pneg %p141
        %p589 = pneg %p165
        %p590 = pneg %p162
        %p591 = pneg %p186
        %p592 = pneg %p183
        %p593 = pneg %p207
        %p594 = pneg %p204
        %p595 = pneg %p228
        %p596 = pneg %p225
        %p597 = pneg %p249
        %p598 = pneg %p246
        %p599 = pneg %p270
        %p600 = pneg %p267
        %p601 = pneg %p291
        %p602 = pneg %p288
        %p603 = pneg %p312
        %p604 = pneg %p309
        %p605 = pneg %p333
        %p606 = pneg %p330
        %p607 = pneg %p354
        %p608 = pneg %p351
        %p609 = pneg %p375
        %p610 = pneg %p372
        %p611 = pneg %p396
        %p612 = pneg %p393
        %p613 = pneg %p417
        %p614 = pneg %p414
        %p615 = pneg %p438
        %p616 = pneg %p435
        %p617 = pneg %p464
        %p618 = pneg %p461
        %s619 = sand.u32 %s451, 1
        %s620 = scalar_lea.sflag [#allocation4], %s619
        %s621 = sand.u32 %s451, 1
        %s622 = smul.addr %s621, 8
        %s623 = scalar_lea.vmem [#allocation5], %s622
        %p624 = scmp.lt.s32.totalorder %s34, 1
        %s625 = scalar_select %p624, %s34, 1
        %s626 = smul.addr %s625, 8
        %s627 = scalar_lea.vmem %s0, %s626
        %p628 = scmp.lt.s32.totalorder %s34, 1
        %s629 = scalar_select %p628, %s34, 1
        %s630 = smul.addr %s629, 8
        %s631 = scalar_lea.vmem %s1, %s630
        %v633 = vld [vmem:[%s627] sm:$0xff]
        %v634 = vld [vmem:[%s631] sm:$0xff]
        %v635 = vld [vmem:[%s18] sm:$0xf]
        %v636 = vpack.c.bf16 %v633, %v633
        %v637 = vld [vmem:[%s2] sm:$0xf]
        %v638 = vld [vmem:[%s2 + $0x4] sm:$0xf]
        %v639 = vld [vmem:[%s2 + $0x8] sm:$0xf]
        %v640 = vld [vmem:[%s2 + $0xc] sm:$0xf]
        %v641 = vld [vmem:[%s3] sm:$0x1]
        %v643 = vperm.slane %v641, 0
        %v649 = vunpack.c.l.b16 %v637
        %v650 = vunpack.c.l.b16 %v638
        %v651 = vunpack.c.l.b16 %v639
        %v652 = vunpack.c.l.b16 %v640
        %v653 = vpack.c.b16 %v650, %v649
        %v654 = vpack.c.b16 %v652, %v651
        %vm657 = vcmask 261120
        %v659 = vsel %vm657, %v636, 0
        %661 = vmatpush.bf16.msra.mxu0 0
        %662 = vmatpush.bf16.msra.mxu0 0
        %663 = vmatpush.bf16.msra.mxu0 0
        %664 = vmatpush.bf16.msra.mxu0 0
        %665 = vmatpush.bf16.msra.mxu0 0
        %666 = vmatpush.bf16.msra.mxu0 0
        %667 = vmatpush.bf16.msra.mxu0 %v654
        %668 = vmatpush.bf16.msra.mxu0 %v653
        %669 = vmatmul.bf16.gmra.mxu0 %v659
        %v670 = vpop.f32.mrf.mxu0
        %v671 = vadd.f32 %v643, %v670
        %v672 = vpop.f32.mrf.mxu0
        %673 = vdwg.mxu0
        %675 = vset.pattern.permute.xlu0 0
        %676 = vperm.xlu0 %675, %v634
        %v677 = vpop.permute.xlu0 %676
        %v679 = vadd.f32 %v671, %v677
        %vm680 = vcmask 556544
        %v681 = vsel %vm680, %v679, -inf
        %v682 = vrot.slane %v681, 4
        %v683 = vmax.f32 %v681, %v682
        %v684 = vrot.slane %v683, 2
        %v685 = vmax.f32 %v683, %v684
        %v686 = vrot.slane %v685, 1
        %v687 = vmax.f32 %v685, %v686
        %v688 = vsub.f32 %v679, %v687
        %v689 = vmul.f32 %v688, 1.442695
        %v690 = vpow.pop %v689
        %v691 = vsel %vm680, %v690, 0.0
        %v692 = vrot.slane %v691, 4
        %v693 = vadd.f32 %v691, %v692
        %v694 = vrot.slane %v693, 2
        %v695 = vadd.f32 %v693, %v694
        %v696 = vrot.slane %v695, 1
        %v697 = vadd.f32 %v695, %v696
        %v698 = vrcp.pop %v697
        %v699 = vmul.f32 %v690, %v698
        %701 = vrot.lane.b32.xlu0 %v699, 64
        %v702 = vpop.permute.xlu0 %701
        %704 = vxpose.xlu0.b32.start [1/16] %v702, 128
        %705 = vxpose.xlu0.b32.cont [2/16] 0.0, 128
        %706 = vxpose.xlu0.b32.cont [3/16] 0.0, 128
        %707 = vxpose.xlu0.b32.cont [4/16] 0.0, 128
        %708 = vxpose.xlu0.b32.cont [5/16] 0.0, 128
        %709 = vxpose.xlu0.b32.cont [6/16] 0.0, 128
        %710 = vxpose.xlu0.b32.cont [7/16] 0.0, 128
        %711 = vxpose.xlu0.b32.cont [8/16] 0.0, 128
        %712 = vxpose.xlu0.b32.cont [9/16] 0.0, 128
        %713 = vxpose.xlu0.b32.cont [10/16] 0.0, 128
        %714 = vxpose.xlu0.b32.cont [11/16] 0.0, 128
        %715 = vxpose.xlu0.b32.cont [12/16] 0.0, 128
        %716 = vxpose.xlu0.b32.cont [13/16] 0.0, 128
        %717 = vxpose.xlu0.b32.cont [14/16] 0.0, 128
        %718 = vxpose.xlu0.b32.cont [15/16] 0.0, 128
        %719 = vxpose.xlu0.b32.end [16/16] 0.0, 128
        %v720 = vpop.trf.xlu0
        %v721 = vpop.trf.xlu0
        %v722 = vpop.trf.xlu0
        %v723 = vpop.trf.xlu0
        %v724 = vpop.trf.xlu0
        %v725 = vpop.trf.xlu0
        %v726 = vpop.trf.xlu0
        %v727 = vpop.trf.xlu0
        %v728 = vpop.trf.xlu0
        %v729 = vpop.trf.xlu0
        %v730 = vpop.trf.xlu0
        %v731 = vpop.trf.xlu0
        %v732 = vpop.trf.xlu0
        %v733 = vpop.trf.xlu0
        %v734 = vpop.trf.xlu0
        %v735 = vpop.trf.xlu0
        %vm736 = vcmask 64512
        %v738 = vsel %vm736, %v720, 0
        %740 = vmatpush.msra.mxu0 0.0
        %741 = vmatpush.msra.mxu0 0.0
        %742 = vmatpush.msra.mxu0 0.0
        %743 = vmatpush.msra.mxu0 0.0
        %744 = vmatpush.msra.mxu0 0.0
        %745 = vmatpush.msra.mxu0 0.0
        %746 = vmatpush.msra.mxu0 0.0
        %747 = vmatpush.msra.mxu0 0.0
        %748 = vmatpush.msra.mxu0 0.0
        %749 = vmatpush.msra.mxu0 0.0
        %750 = vmatpush.msra.mxu0 0.0
        %751 = vmatpush.msra.mxu0 0.0
        %752 = vmatpush.msra.mxu0 0.0
        %753 = vmatpush.msra.mxu0 0.0
        %754 = vmatpush.msra.mxu0 0.0
        %755 = vmatpush.msra.mxu0 %v671
        %756 = vmatmul.f32.gmra.mxu0 %v738
        %v757 = vpop.f32.mrf.mxu0
        %v758 = vadd.f32 0.0, %v757
        %759 = vdwg.mxu0
        %v760 = vmul.f32 %v635, %v758
        %vm761 = vcmask 257024
        %v762 = vsel %vm761, %v760, 0.0
        %v763 = vrot.slane %v762, 4
        %v764 = vadd.f32 %v762, %v763
        %v765 = vrot.slane %v764, 2
        %v766 = vadd.f32 %v764, %v765
        %v767 = vrot.slane %v766, 1
        %v768 = vadd.f32 %v766, %v767
        %770 = vrot.lane.b32.xlu0 %v768, 32
        %v771 = vpop.permute.xlu0 %770
        %v773 = vmul.f32 %v671, %v771
        %v774 = vpack.c.bf16 %v773, %v773
        %v775 = vld [vmem:[%s4] sm:$0xf]
        %v776 = vld [vmem:[%s4 + $0x4] sm:$0xf]
        %v777 = vld [vmem:[%s4 + $0x8] sm:$0xf]
        %v778 = vld [vmem:[%s4 + $0xc] sm:$0xf]
        %v779 = vld [vmem:[%s5] sm:$0x1]
        %v781 = vperm.slane %v779, 0
        %784 = vrot.lane.b32.xlu0 %v774, 96
        %v785 = vpop.permute.xlu0 %784
        %v790 = vunpack.c.l.b16 %v775
        %v791 = vunpack.c.l.b16 %v776
        %v792 = vunpack.c.l.b16 %v777
        %v793 = vunpack.c.l.b16 %v778
        %v794 = vpack.c.b16 %v791, %v790
        %v795 = vpack.c.b16 %v793, %v792
        %v799 = vsel %vm657, %v785, 0
        %801 = vmatpush.bf16.msra.mxu0 0
        %802 = vmatpush.bf16.msra.mxu0 0
        %803 = vmatpush.bf16.msra.mxu0 0
        %804 = vmatpush.bf16.msra.mxu0 0
        %805 = vmatpush.bf16.msra.mxu0 0
        %806 = vmatpush.bf16.msra.mxu0 0
        %807 = vmatpush.bf16.msra.mxu0 %v795
        %808 = vmatpush.bf16.msra.mxu0 %v794
        %809 = vmatmul.bf16.gmra.mxu0 %v799
        %v810 = vpop.f32.mrf.mxu0
        %v811 = vadd.f32 %v781, %v810
        %v812 = vpop.f32.mrf.mxu0
        %813 = vdwg.mxu0
        %v814 = vadd.f32 %v811, %v677
        %vm815 = vcmask 31744
        %v816 = vsel %vm815, %v814, -inf
        %v817 = vrot.slane %v816, 4
        %v818 = vmax.f32 %v816, %v817
        %v819 = vrot.slane %v818, 2
        %v820 = vmax.f32 %v818, %v819
        %v821 = vrot.slane %v820, 1
        %v822 = vmax.f32 %v820, %v821
        %v823 = vsub.f32 %v814, %v822
        %v824 = vmul.f32 %v823, 1.442695
        %v825 = vpow.pop %v824
        %v826 = vsel %vm815, %v825, 0.0
        %v827 = vrot.slane %v826, 4
        %v828 = vadd.f32 %v826, %v827
        %v829 = vrot.slane %v828, 2
        %v830 = vadd.f32 %v828, %v829
        %v831 = vrot.slane %v830, 1
        %v832 = vadd.f32 %v830, %v831
        %v833 = vrcp.pop %v832
        %v834 = vmul.f32 %v825, %v833
        %835 = vxpose.xlu0.b32.start [1/16] %v834, 128
        %836 = vxpose.xlu0.b32.cont [2/16] 0.0, 128
        %837 = vxpose.xlu0.b32.cont [3/16] 0.0, 128
        %838 = vxpose.xlu0.b32.cont [4/16] 0.0, 128
        %839 = vxpose.xlu0.b32.cont [5/16] 0.0, 128
        %840 = vxpose.xlu0.b32.cont [6/16] 0.0, 128
        %841 = vxpose.xlu0.b32.cont [7/16] 0.0, 128
        %842 = vxpose.xlu0.b32.cont [8/16] 0.0, 128
        %843 = vxpose.xlu0.b32.cont [9/16] 0.0, 128
        %844 = vxpose.xlu0.b32.cont [10/16] 0.0, 128
        %845 = vxpose.xlu0.b32.cont [11/16] 0.0, 128
        %846 = vxpose.xlu0.b32.cont [12/16] 0.0, 128
        %847 = vxpose.xlu0.b32.cont [13/16] 0.0, 128
        %848 = vxpose.xlu0.b32.cont [14/16] 0.0, 128
        %849 = vxpose.xlu0.b32.cont [15/16] 0.0, 128
        %850 = vxpose.xlu0.b32.end [16/16] 0.0, 128
        %v851 = vpop.trf.xlu0
        %v852 = vpop.trf.xlu0
        %v853 = vpop.trf.xlu0
        %v854 = vpop.trf.xlu0
        %v855 = vpop.trf.xlu0
        %v856 = vpop.trf.xlu0
        %v857 = vpop.trf.xlu0
        %v858 = vpop.trf.xlu0
        %v859 = vpop.trf.xlu0
        %v860 = vpop.trf.xlu0
        %v861 = vpop.trf.xlu0
        %v862 = vpop.trf.xlu0
        %v863 = vpop.trf.xlu0
        %v864 = vpop.trf.xlu0
        %v865 = vpop.trf.xlu0
        %v866 = vpop.trf.xlu0
        %868 = vrot.lane.b32.xlu0 %v773, 96
        %v869 = vpop.permute.xlu0 %868
        %v872 = vsel %vm736, %v851, 0
        %874 = vmatpush.msra.mxu0 0.0
        %875 = vmatpush.msra.mxu0 0.0
        %876 = vmatpush.msra.mxu0 0.0
        %877 = vmatpush.msra.mxu0 0.0
        %878 = vmatpush.msra.mxu0 0.0
        %879 = vmatpush.msra.mxu0 0.0
        %880 = vmatpush.msra.mxu0 0.0
        %881 = vmatpush.msra.mxu0 0.0
        %882 = vmatpush.msra.mxu0 0.0
        %883 = vmatpush.msra.mxu0 0.0
        %884 = vmatpush.msra.mxu0 0.0
        %885 = vmatpush.msra.mxu0 0.0
        %886 = vmatpush.msra.mxu0 0.0
        %887 = vmatpush.msra.mxu0 0.0
        %888 = vmatpush.msra.mxu0 0.0
        %889 = vmatpush.msra.mxu0 %v869
        %890 = vmatmul.f32.gmra.mxu0 %v872
        %v891 = vpop.f32.mrf.mxu0
        %v892 = vadd.f32 0.0, %v891
        %893 = vdwg.mxu0
        %v894 = vmul.f32 %v635, %v892
        %v895 = vsel %vm761, %v894, 0.0
        %v896 = vrot.slane %v895, 4
        %v897 = vadd.f32 %v895, %v896
        %v898 = vrot.slane %v897, 2
        %v899 = vadd.f32 %v897, %v898
        %v900 = vrot.slane %v899, 1
        %v901 = vadd.f32 %v899, %v900
        %v902 = vmul.f32 %v901, %v671
        %v903 = vpack.c.bf16 %v902, %v902
        %v904 = vld [vmem:[%s6] sm:$0xf]
        %v905 = vld [vmem:[%s6 + $0x4] sm:$0xf]
        %v906 = vld [vmem:[%s6 + $0x8] sm:$0xf]
        %v907 = vld [vmem:[%s6 + $0xc] sm:$0xf]
        %v908 = vld [vmem:[%s7] sm:$0x1]
        %v910 = vperm.slane %v908, 0
        %v916 = vunpack.c.l.b16 %v904
        %v917 = vunpack.c.l.b16 %v905
        %v918 = vunpack.c.l.b16 %v906
        %v919 = vunpack.c.l.b16 %v907
        %v920 = vpack.c.b16 %v917, %v916
        %v921 = vpack.c.b16 %v919, %v918
        %v925 = vsel %vm657, %v903, 0
        %927 = vmatpush.bf16.msra.mxu0 0
        %928 = vmatpush.bf16.msra.mxu0 0
        %929 = vmatpush.bf16.msra.mxu0 0
        %930 = vmatpush.bf16.msra.mxu0 0
        %931 = vmatpush.bf16.msra.mxu0 0
        %932 = vmatpush.bf16.msra.mxu0 0
        %933 = vmatpush.bf16.msra.mxu0 %v921
        %934 = vmatpush.bf16.msra.mxu0 %v920
        %935 = vmatmul.bf16.gmra.mxu0 %v925
        %v936 = vpop.f32.mrf.mxu0
        %v937 = vadd.f32 %v910, %v936
        %v938 = vpop.f32.mrf.mxu0
        %939 = vdwg.mxu0
        %v940 = vadd.f32 %v937, %v671
        %v941 = vpack.c.bf16 %v940, %v940
        %v942 = vld [vmem:[%s8] sm:$0xf]
        %v943 = vld [vmem:[%s8 + $0x4] sm:$0xf]
        %v944 = vld [vmem:[%s8 + $0x8] sm:$0xf]
        %v945 = vld [vmem:[%s8 + $0xc] sm:$0xf]
        %v946 = vld [vmem:[%s9] sm:$0x1]
        %v948 = vperm.slane %v946, 0
        %v954 = vunpack.c.l.b16 %v942
        %v955 = vunpack.c.l.b16 %v943
        %v956 = vunpack.c.l.b16 %v944
        %v957 = vunpack.c.l.b16 %v945
        %v958 = vpack.c.b16 %v955, %v954
        %v959 = vpack.c.b16 %v957, %v956
        %v963 = vsel %vm657, %v941, 0
        %965 = vmatpush.bf16.msra.mxu0 0
        %966 = vmatpush.bf16.msra.mxu0 0
        %967 = vmatpush.bf16.msra.mxu0 0
        %968 = vmatpush.bf16.msra.mxu0 0
        %969 = vmatpush.bf16.msra.mxu0 0
        %970 = vmatpush.bf16.msra.mxu0 0
        %971 = vmatpush.bf16.msra.mxu0 %v959
        %972 = vmatpush.bf16.msra.mxu0 %v958
        %973 = vmatmul.bf16.gmra.mxu0 %v963
        %v974 = vpop.f32.mrf.mxu0
        %v975 = vadd.f32 %v948, %v974
        %v976 = vpop.f32.mrf.mxu0
        %977 = vdwg.mxu0
        %v978 = vadd.f32 %v975, %v633
        %v979 = vld [vmem:[%s10] sm:$0x1]
        %v980 = vld [vmem:[%s11] sm:$0x1]
        %v981 = vsel %vm657, %v978, 0.0
        %982 = vadd.xlane.f32.xlu0 %v981
        %v983 = vpop.xlane.xlu0 %982
        %v984 = vrcp.pop 32.0
        %v985 = vmul.f32 32.0, %v984
        %v986 = vsub.f32 1.0, %v985
        %v987 = vmul.f32 %v984, %v986
        %v988 = vadd.f32 %v984, %v987
        %vm989 = vweird.f32 %v984
        %v990 = vsel %vm989, %v984, %v988
        %v991 = vmul.f32 %v983, %v990
        %v992 = vmul.f32 %v978, %v978
        %v993 = vsel %vm657, %v992, 0.0
        %994 = vadd.xlane.f32.xlu0 %v993
        %v995 = vpop.xlane.xlu0 %994
        %v996 = vmul.f32 %v995, %v990
        %v997 = vmul.f32 %v991, %v991
        %v998 = vsub.f32 %v996, %v997
        %v999 = vmax.f32 %v998, 0.0
        %v1000 = vsub.f32 %v978, %v991
        %v1001 = vadd.f32 %v999, 1e-12
        %v1002 = vrsqrt.pop %v1001
        %v1003 = vmul.f32 %v1002, %v1001
        %v1004 = vmul.f32 %v1003, %v1002
        %v1005 = vmul.f32 0.5, %v1004
        %v1006 = vsub.f32 1.5, %v1005
        %v1007 = vmul.f32 %v1002, %v1006
        %vm1008 = vweird.f32 %v1001
        %vm1009 = vweird.f32 %v1002
        %vm1010 = vmor %vm1008, %vm1009
        %v1011 = vsel %vm1010, %v1002, %v1007
        %v1012 = vmul.f32 %v1000, %v1011
        %v1014 = vperm.slane %v979, 0
        %v1016 = vmul.f32 %v1012, %v1014
        %v1018 = vperm.slane %v980, 0
        %v1020 = vadd.f32 %v1016, %v1018
        %v1021 = vpack.c.bf16 %v1020, %v1020
        %v1022 = vld [vmem:[#allocation2] sm:$0xf]
        %v1023 = vld [vmem:[#allocation2 + $0x4] sm:$0xf]
        %v1024 = vld [vmem:[#allocation2 + $0x8] sm:$0xf]
        %v1025 = vld [vmem:[#allocation2 + $0xc] sm:$0xf]
        %v1026 = vld [vmem:[%s13] sm:$0x1]
        %v1028 = vperm.slane %v1026, 0
        %v1034 = vunpack.c.l.b16 %v1022
        %v1035 = vunpack.c.l.b16 %v1023
        %v1036 = vunpack.c.l.b16 %v1024
        %v1037 = vunpack.c.l.b16 %v1025
        %v1038 = vpack.c.b16 %v1035, %v1034
        %v1039 = vpack.c.b16 %v1037, %v1036
        %v1043 = vsel %vm657, %v1021, 0
        %1045 = vmatpush.bf16.msra.mxu0 0
        %1046 = vmatpush.bf16.msra.mxu0 0
        %1047 = vmatpush.bf16.msra.mxu0 0
        %1048 = vmatpush.bf16.msra.mxu0 0
        %1049 = vmatpush.bf16.msra.mxu0 0
        %1050 = vmatpush.bf16.msra.mxu0 0
        %1051 = vmatpush.bf16.msra.mxu0 %v1039
        %1052 = vmatpush.bf16.msra.mxu0 %v1038
        %1053 = vmatmul.bf16.gmra.mxu0 %v1043
        %v1054 = vpop.f32.mrf.mxu0
        %v1055 = vadd.f32 %v1028, %v1054
        %v1056 = vpop.f32.mrf.mxu0
        %1057 = vdwg.mxu0
        %v1058 = vmul.f32 %v1055, 0.5
        %v1059 = vmul.f32 %v1055, 0.70710677
        %v1060 = vmul.f32 %v1059, %v1059
        %v1061 = vmin.f32 16.0, %v1060
        %v1062 = vmul.f32 %v1061, 2.1237322e-06
        %v1063 = vadd.f32 %v1062, 0.00028619796
        %v1064 = vmul.f32 %v1061, %v1063
        %v1065 = vadd.f32 %v1064, 0.0036580483
        %v1066 = vmul.f32 %v1061, %v1065
        %v1067 = vadd.f32 %v1066, 0.05243302
        %v1068 = vmul.f32 %v1061, %v1067
        %v1069 = vadd.f32 %v1068, 0.18741608
        %v1070 = vmul.f32 %v1061, %v1069
        %v1071 = vadd.f32 %v1070, 1.1283791
        %v1072 = vmul.f32 %v1059, %v1071
        %v1073 = vmul.f32 %v1061, 3.8918573e-05
        %v1074 = vadd.f32 %v1073, 0.001143296
        %v1075 = vmul.f32 %v1061, %v1074
        %v1076 = vadd.f32 %v1075, 0.014752088
        %v1077 = vmul.f32 %v1061, %v1076
        %v1078 = vadd.f32 %v1077, 0.112945676
        %v1079 = vmul.f32 %v1061, %v1078
        %v1080 = vadd.f32 %v1079, 0.4994258
        %v1081 = vmul.f32 %v1061, %v1080
        %v1082 = vadd.f32 %v1081, 1.0
        %v1083 = vrcp.pop %v1082
        %v1084 = vmul.f32 %v1082, %v1083
        %v1085 = vsub.f32 1.0, %v1084
        %v1086 = vmul.f32 %v1083, %v1085
        %v1087 = vadd.f32 %v1083, %v1086
        %vm1088 = vweird.f32 %v1082
        %vm1089 = vweird.f32 %v1083
        %vm1090 = vmor %vm1088, %vm1089
        %v1091 = vsel %vm1090, %v1083, %v1087
        %v1092 = vand.u32 2147483647, %v1082
        %vm1093 = vcmp.eq.f32.partialorder %v1092, 8.507059e+37
        %v1094 = vand.u32 %v1082, 2147483648
        %v1095 = vor.u32 1.1754944e-38, %v1094
        %v1096 = vsel %vm1093, %v1095, %v1091
        %v1097 = vmul.f32 %v1072, %v1096
        %v1098 = vmin.f32 %v1097, 1.0
        %v1099 = vmax.f32 %v1098, -1.0
        %v1100 = vadd.f32 %v1099, 1.0
        %v1101 = vmul.f32 %v1058, %v1100
        %v1102 = vpack.c.bf16 %v1101, %v1101
        %v1103 = vld [vmem:[%s14] sm:$0xf]
        %v1104 = vld [vmem:[%s14 + $0x4] sm:$0xf]
        %v1105 = vld [vmem:[%s14 + $0x8] sm:$0xf]
        %v1106 = vld [vmem:[%s14 + $0xc] sm:$0xf]
        %v1107 = vld [vmem:[%s14 + $0x10] sm:$0xf]
        %v1108 = vld [vmem:[%s14 + $0x14] sm:$0xf]
        %v1109 = vld [vmem:[%s14 + $0x18] sm:$0xf]
        %v1110 = vld [vmem:[%s14 + $0x1c] sm:$0xf]
        %v1111 = vld [vmem:[%s15] sm:$0x1]
        %v1113 = vperm.slane %v1111, 0
        %v1123 = vunpack.c.l.b16 %v1103
        %v1124 = vunpack.c.l.b16 %v1104
        %v1125 = vunpack.c.l.b16 %v1105
        %v1126 = vunpack.c.l.b16 %v1106
        %v1127 = vunpack.c.l.b16 %v1107
        %v1128 = vunpack.c.l.b16 %v1108
        %v1129 = vunpack.c.l.b16 %v1109
        %v1130 = vunpack.c.l.b16 %v1110
        %v1131 = vpack.c.b16 %v1124, %v1123
        %v1132 = vpack.c.b16 %v1126, %v1125
        %v1133 = vpack.c.b16 %v1128, %v1127
        %v1134 = vpack.c.b16 %v1130, %v1129
        %vm1139 = vcmask 523264
        %v1141 = vsel %vm1139, %v1102, 0
        %1143 = vmatpush.bf16.msra.mxu0 0
        %1144 = vmatpush.bf16.msra.mxu0 0
        %1145 = vmatpush.bf16.msra.mxu0 0
        %1146 = vmatpush.bf16.msra.mxu0 0
        %1147 = vmatpush.bf16.msra.mxu0 %v1134
        %1148 = vmatpush.bf16.msra.mxu0 %v1133
        %1149 = vmatpush.bf16.msra.mxu0 %v1132
        %1150 = vmatpush.bf16.msra.mxu0 %v1131
        %1151 = vmatmul.bf16.gmra.mxu0 %v1141
        %v1152 = vpop.f32.mrf.mxu0
        %v1153 = vadd.f32 %v1113, %v1152
        %v1154 = vpop.f32.mrf.mxu0
        %1155 = vdwg.mxu0
        %v1156 = vadd.f32 %v1153, %v1020
        %v1157 = vld [vmem:[%s16] sm:$0x1]
        %v1158 = vld [vmem:[%s17] sm:$0x1]
        %v1159 = vsel %vm657, %v1156, 0.0
        %1160 = vadd.xlane.f32.xlu0 %v1159
        %v1161 = vpop.xlane.xlu0 %1160
        %v1162 = vmul.f32 %v1161, %v990
        %v1163 = vmul.f32 %v1156, %v1156
        %v1164 = vsel %vm657, %v1163, 0.0
        %1165 = vadd.xlane.f32.xlu0 %v1164
        %v1166 = vpop.xlane.xlu0 %1165
        %v1167 = vmul.f32 %v1166, %v990
        %v1168 = vmul.f32 %v1162, %v1162
        %v1169 = vsub.f32 %v1167, %v1168
        %v1170 = vmax.f32 %v1169, 0.0
        %v1171 = vsub.f32 %v1156, %v1162
        %v1172 = vadd.f32 %v1170, 1e-12
        %v1173 = vrsqrt.pop %v1172
        %v1174 = vmul.f32 %v1173, %v1172
        %v1175 = vmul.f32 %v1174, %v1173
        %v1176 = vmul.f32 0.5, %v1175
        %v1177 = vsub.f32 1.5, %v1176
        %v1178 = vmul.f32 %v1173, %v1177
        %vm1179 = vweird.f32 %v1172
        %vm1180 = vweird.f32 %v1173
        %vm1181 = vmor %vm1179, %vm1180
        %v1182 = vsel %vm1181, %v1173, %v1178
        %v1183 = vmul.f32 %v1171, %v1182
        %v1185 = vperm.slane %v1157, 0
        %v1187 = vmul.f32 %v1183, %v1185
        %v1189 = vperm.slane %v1158, 0
        %v1191 = vadd.f32 %v1187, %v1189
        %1192 = vst.msk [vmem:[%s623] sm:$0xff] %vm657, %v1191
        %s1193 = sand.u32 %s451, 1
        %s1194 = scalar_lea.sflag [#allocation4], %s1193
        %s1195 = sand.u32 %s451, 1
        %s1196 = smul.addr %s1195, 8
        %s1197 = scalar_lea.vmem [#allocation5], %s1196
        // Predicated region
        $region101: #{tpu_custom_call.1} parent=95 // pred_check
          %p1198 = pneg %p461
        $region102: #{tpu_custom_call.1} parent=95 // pred_check_branch
          %1200 = sbr.rel (%p1198) target = $region104
        $region103: #{tpu_custom_call.1} parent=95 // pred_region
          %1202 = vsyncadd %s1194, 0
          %s1203 = smul.addr %s34, 8
          %s1204 = scalar_lea.hbm %s19, %s1203
          %s1206 = sshll.u32 %s1197, 4
          %s1207 = int_to_ptr.vmem [resolvable:$true] %s1206
          %s1208 = sshll.u32 %s1204, 4
          %s1209 = int_to_ptr.hbm [resolvable:$true] %s1208
          %1211 = dma.vmem_to_hbm [thread:$0]  %s1207, 128, %s1209, %s1194
        $region104: #{tpu_custom_call.1} parent=95 // pred_fallthru
          _
      $region96: #{tpu_custom_call.1} parent=5 // pred_fallthru
        _
      %p1212 = scmp.le.s32.totalorder 2, %s29
      // Predicated region
      $region105: #{tpu_custom_call.1} parent=5 // pred_check
        %p1213 = pneg %p1212
      $region106: #{tpu_custom_call.1} parent=5 // pred_check_branch
        %1215 = sbr.rel (%p1213) target = $region108
      $region107: #{tpu_custom_call.1} parent=5 // pred_region
        %s1216 = ssub.s32 %s29, 2
        // Predicated region
        $region109: #{tpu_custom_call.1} parent=107 // pred_check
          %p1217 = pneg %p467
        $region110: #{tpu_custom_call.1} parent=107 // pred_check_branch
          %1219 = sbr.rel (%p1217) target = $region112
        $region111: #{tpu_custom_call.1} parent=107 // pred_region
          %s1220 = sand.u32 %s452, 1
          %s1221 = scalar_lea.sflag [#allocation4], %s1220
          %s1222 = sand.u32 %s452, 1
          %s1223 = smul.addr %s1222, 8
          %s1224 = scalar_lea.vmem [#allocation5], %s1223
          %1226 = dma.done %s1221, 128
        $region112: #{tpu_custom_call.1} parent=107 // pred_fallthru
          _
      $region108: #{tpu_custom_call.1} parent=5 // pred_fallthru
        _
    $region6: #{tpu_custom_call.1} parent=1 // loop_footer
      %s33 = sadd.s32 1, %s29
    $region7: #{tpu_custom_call.1} parent=1 // loop_footer_branch
      %28 = sbr.rel target = $region3
    $region8: #{tpu_custom_call.1} parent=1 // loop_exit
      _
    %1227 = vsyncpa [#allocation3], 1
    %s1228 = scalar_lea.sflag [#allocation3], 1
    %1229 = vsyncpa %s1228, 1
    %1230 = vsyncpa [#allocation4], 1
    %s1231 = scalar_lea.sflag [#allocation4], 1
    %1232 = vsyncpa %s1231, 1

</llo_original>
